<compile_context>
chip_gen: v7x
topology: tpu7x:2x2x1
jax: 0.10.0
libtpu: 0.0.40
codegen_flags: <defaults>
</compile_context>

<pallas_src>
import functools
import math

import jax
import jax.numpy as jnp
from jax import lax
from jax.experimental import pallas as pl
from jax.experimental.pallas import tpu as pltpu  # noqa: F401  (kept for completeness)


# ----------------------------------------------------------------------------- helpers
def _full_spec(shape):
    n = len(shape)
    return pl.BlockSpec(shape, lambda *_, **__: (0,) * n)


# ------------------------------------------------------------------- fused cleaving kernel
def _make_cleaving_kernel(*, batch_in, track_len, hidden, num_layers, id_len):
    S = batch_in          # GRU sequence length (batch_first=False -> dim 0 of feat)
    B = track_len         # GRU batch size
    H = hidden
    L = num_layers
    f32 = jnp.float32

    def kernel(x_ref, wfe_ref, bfe_ref, *rest):
        gru_refs = rest[:6 * L]
        (wfeat_ref, bfeat_ref, ws1_ref, bs1_ref, ws2_ref, bs2_ref,
         wp_ref, bp_ref, of_ref, ob_ref, srh_ref, pur_ref) = rest[6 * L:]

        # ---------------- 1. feature extractor (single MXU push) ----------------
        # base[t, :] == feat[j, t, :] for every j (the reference's feat is
        # j-independent); it is the GRU input at every sequence position, and
        # feat_back == feat, so one bidirectional pass covers both siamese passes.
        base = (jnp.dot(x_ref[...], wfe_ref[...], preferred_element_type=f32)
                + bfe_ref[...])                                  # (track_len, feat_size)

        # ---------------- 2. multi-layer bidirectional GRU ----------------
        outs_f = [None] * S   # forward-direction outputs, indexed by seq position
        outs_b = [None] * S   # backward-direction outputs, indexed by seq position
        for l in range(L):
            (wih_f_ref, bih_f_ref, wih_b_ref, bih_b_ref,
             whhc_ref, bhhc_ref) = gru_refs[6 * l: 6 * l + 6]
            wih_f, bih_f = wih_f_ref[...], bih_f_ref[...]
            wih_b, bih_b = wih_b_ref[...], bih_b_ref[...]
            whh_c, bhh_c = whhc_ref[...], bhhc_ref[...]

            # --- input projections hoisted out of the serial recurrence ---
            if l == 0:
                # layer-0 input is time-invariant (feat broadcast over batch_in)
                gi_f0 = jnp.dot(base, wih_f, preferred_element_type=f32) + bih_f
                gi_b0 = jnp.dot(base, wih_b, preferred_element_type=f32) + bih_b
                gi_f = [gi_f0] * S
                gi_b = [gi_b0] * S
            else:
                src = jnp.concatenate(
                    [jnp.concatenate([outs_f[t], outs_b[t]], axis=1) for t in range(S)],
                    axis=0)                                      # (S*B, 2H)  [fwd|bwd]
                gif_all = jnp.dot(src, wih_f, preferred_element_type=f32) + bih_f
                gib_all = jnp.dot(src, wih_b, preferred_element_type=f32) + bih_b
                gi_f = [gif_all[t * B:(t + 1) * B] for t in range(S)]
                gi_b = [gib_all[t * B:(t + 1) * B] for t in range(S)]

            # gate-grouped combined input projections (off the serial chain):
            # columns = [r_f r_b | z_f z_b | n_f n_b]
            gi_c = []
            for t in range(S):
                tb = S - 1 - t
                gi_c.append(jnp.concatenate(
                    [gi_f[t][:, 0:H],         gi_b[tb][:, 0:H],
                     gi_f[t][:, H:2 * H],     gi_b[tb][:, H:2 * H],
                     gi_f[t][:, 2 * H:3 * H], gi_b[tb][:, 2 * H:3 * H]], axis=1))

            # --- serial recurrence: fwd (time t) and bwd (time S-1-t) fused ---
            h2 = jnp.zeros((B, 2 * H), f32)                      # [h_fwd | h_bwd], h0 = 0
            new_f = [None] * S
            new_b = [None] * S
            for t in range(S):
                tb = S - 1 - t
                gh = jnp.dot(h2, whh_c, preferred_element_type=f32) + bhh_c   # (B, 6H)
                rz = jax.nn.sigmoid(gi_c[t][:, 0:4 * H] + gh[:, 0:4 * H])
                r, z = rz[:, 0:2 * H], rz[:, 2 * H:4 * H]
                n = jnp.tanh(gi_c[t][:, 4 * H:6 * H] + r * gh[:, 4 * H:6 * H])
                h2 = h2 + (1.0 - z) * (n - h2)                   # == (1-z)*n + z*h
                new_f[t] = h2[:, 0:H]
                new_b[tb] = h2[:, H:2 * H]
            outs_f, outs_b = new_f, new_b
            # dropout between layers is an eval-mode no-op

        # outs_f[j] == phi_g_for[j] (track_len, H); outs_b[j] == phi_g_back[j]

        # ---------------- 3. feat_fcn (one matmul per branch) ----------------
        wfeat, bfeat = wfeat_ref[...], bfeat_ref[...]
        phi_f = jnp.concatenate(outs_f, axis=0)                  # (Bn*T, H), row = j*T + t
        phi_b = jnp.concatenate(outs_b, axis=0)
        of_ref[...] = (jnp.dot(phi_f, wfeat, preferred_element_type=f32)
                       + bfeat).astype(of_ref.dtype)
        ob_ref[...] = (jnp.dot(phi_b, wfeat, preferred_element_type=f32)
                       + bfeat).astype(ob_ref.dtype)

        # ---------------- 4. phi_d, srh_fcn, pur_fcn ----------------
        # phi_d[j, t] = || phi_g_for[j, 1+t] - phi_g_back[Bn-1-j, 1+t] ||_2
        ones_h = jnp.ones((1, H), f32)
        rows = []
        for j in range(S):
            d = outs_f[j][1:, :] - outs_b[S - 1 - j][1:, :]      # (T-1, H)
            # contract the last dims (A @ B^T pattern) -> lane-major (1, T-1) row
            rows.append(lax.dot_general(ones_h, d * d,
                                        (((1,), (1,)), ((), ())),
                                        preferred_element_type=f32))
        phi_d = jnp.sqrt(jnp.concatenate(rows, axis=0))          # (Bn, T-1)

        s1 = jnp.dot(phi_d, ws1_ref[...], preferred_element_type=f32) + bs1_ref[...]
        srh_ref[...] = jax.nn.sigmoid(
            jnp.dot(s1, ws2_ref[...], preferred_element_type=f32) + bs2_ref[...]
        ).astype(srh_ref.dtype)
        pur_ref[...] = jax.nn.sigmoid(
            jnp.dot(phi_d, wp_ref[...], preferred_element_type=f32) + bp_ref[...]
        ).astype(pur_ref.dtype)

    return kernel


# ----------------------------------------------------------------------------- params
def init_params(key, *, in_ch, backbone_out, feat_size, hidden, num_layers,
                id_len, track_len, batch_in, wh):
    assert feat_size == batch_in * backbone_out, (
        "feat.view(batch_in, track_len, -1) requires feat_size == batch_in*backbone_out")
    keys = iter(jax.random.split(key, 8 * num_layers + 16))

    def u(shape, scale):
        return jax.random.uniform(next(keys), shape, jnp.float32, -scale, scale)

    H = hidden
    WH = wh[0] * wh[1]
    p = {}

    # synthetic feature extractor (stand-in for seresnext50_32x4d):
    # global-average-pool over W*H then Linear(in_ch, backbone_out).
    w_fe = u((in_ch, backbone_out), 1.0 / math.sqrt(in_ch))
    b_fe = u((1, backbone_out), 1.0 / math.sqrt(in_ch))
    # Fold the pooling (1/WH) into the weight and the per-j concatenation of the
    # reference's feat.view(...) into a block-diagonal weight -> one matmul in-kernel.
    w_rep = jnp.repeat(w_fe / WH, WH, axis=0)                       # (in_ch*WH, backbone_out)
    p["w_fe_bd"] = jnp.kron(jnp.eye(batch_in, dtype=jnp.float32), w_rep)
    p["b_fe_bd"] = jnp.tile(b_fe, (1, batch_in))                    # (1, feat_size)

    # bidirectional GRU, gate order [r|z|n]; weights stored as (in, 3H).
    s = 1.0 / math.sqrt(H)
    gru = []
    for l in range(num_layers):
        din = feat_size if l == 0 else 2 * H
        wih_f = u((din, 3 * H), s); bih_f = u((1, 3 * H), s)
        whh_f = u((H, 3 * H), s);   bhh_f = u((1, 3 * H), s)
        wih_b = u((din, 3 * H), s); bih_b = u((1, 3 * H), s)
        whh_b = u((H, 3 * H), s);   bhh_b = u((1, 3 * H), s)
        # pack fwd/bwd recurrent weights into one block-diagonal, gate-grouped
        # matrix so the per-step recurrent matmul is a single MXU push:
        # rows = [h_f ; h_b], columns = [r_f r_b | z_f z_b | n_f n_b]
        whh_comb = jnp.zeros((2 * H, 6 * H), jnp.float32)
        bhh_parts = []
        for g in range(3):
            whh_comb = whh_comb.at[:H, (2 * g) * H:(2 * g + 1) * H].set(
                whh_f[:, g * H:(g + 1) * H])
            whh_comb = whh_comb.at[H:, (2 * g + 1) * H:(2 * g + 2) * H].set(
                whh_b[:, g * H:(g + 1) * H])
            bhh_parts.append(bhh_f[:, g * H:(g + 1) * H])
            bhh_parts.append(bhh_b[:, g * H:(g + 1) * H])
        bhh_comb = jnp.concatenate(bhh_parts, axis=1)               # (1, 6H)
        gru.append(dict(wih_f=wih_f, bih_f=bih_f, wih_b=wih_b, bih_b=bih_b,
                        whh_comb=whh_comb, bhh_comb=bhh_comb))
    p["gru"] = gru

    # feat_fcn: Linear(hidden, id_len)
    p["w_feat"] = u((H, id_len), 1.0 / math.sqrt(H))
    p["b_feat"] = u((1, id_len), 1.0 / math.sqrt(H))

    # srh_fcn: Linear(T-1, T-1) -> Linear(T-1, 2*(T-1)) -> Sigmoid
    t1 = track_len - 1
    p["w_srh1"] = u((t1, t1), 1.0 / math.sqrt(t1))
    p["b_srh1"] = u((1, t1), 1.0 / math.sqrt(t1))
    p["w_srh2"] = u((t1, 2 * t1), 1.0 / math.sqrt(t1))
    p["b_srh2"] = u((1, 2 * t1), 1.0 / math.sqrt(t1))

    # pur_fcn: Linear(T-1, 2) -> Sigmoid
    p["w_pur"] = u((t1, 2), 1.0 / math.sqrt(t1))
    p["b_pur"] = u((1, 2), 1.0 / math.sqrt(t1))
    return p


# ----------------------------------------------------------------------------- forward
def cleaving_forward(x, params, *, track_len, hidden, num_layers, id_len):
    batch_in = x.shape[0]
    T = track_len
    # exact PyTorch semantics: x.view(track_len, batch_in, -1, W, H) is a raw
    # reinterpretation; flattening further (for the block-diagonal extractor
    # weight) is also a pure contiguous reshape (no transpose, no data movement).
    x2 = x.reshape(T, -1)                     # (track_len, batch_in*C*W*H)

    kern = _make_cleaving_kernel(batch_in=batch_in, track_len=T, hidden=hidden,
                                 num_layers=num_layers, id_len=id_len)

    inputs = [x2, params["w_fe_bd"], params["b_fe_bd"]]
    for layer in params["gru"]:
        inputs.extend([layer["wih_f"], layer["bih_f"],
                       layer["wih_b"], layer["bih_b"],
                       layer["whh_comb"], layer["bhh_comb"]])
    inputs.extend([params["w_feat"], params["b_feat"],
                   params["w_srh1"], params["b_srh1"],
                   params["w_srh2"], params["b_srh2"],
                   params["w_pur"], params["b_pur"]])

    t1 = T - 1
    out_shapes = (jax.ShapeDtypeStruct((batch_in * T, id_len), jnp.float32),
                  jax.ShapeDtypeStruct((batch_in * T, id_len), jnp.float32),
                  jax.ShapeDtypeStruct((batch_in, 2 * t1), jnp.float32),
                  jax.ShapeDtypeStruct((batch_in, 2), jnp.float32))

    of, ob, srh, pur = pl.pallas_call(
        kern,
        out_shape=out_shapes,
        in_specs=[_full_spec(a.shape) for a in inputs],
        out_specs=tuple(_full_spec(s.shape) for s in out_shapes),
    )(*inputs)

    # contiguous (free) reshapes back to the reference's (batch_in, T, id_len)
    return (of.reshape(batch_in, T, id_len),
            ob.reshape(batch_in, T, id_len),
            srh, pur)


# ----------------------------------------------------------------------------- main
if __name__ == "__main__":
    # small, shape-consistent configuration
    batch_in = 2
    track_len = 8
    wh = (8, 8)
    in_ch = 3
    hidden = 16
    num_layers = 2
    id_len = 16
    feat_size = 32
    backbone_out = feat_size // batch_in   # required so feat.view(...,-1) == feat_size

    key = jax.random.PRNGKey(0)
    kx, kp = jax.random.split(key)
    x = jax.random.normal(kx, (batch_in, track_len, in_ch, wh[0], wh[1]), jnp.float32)

    params = init_params(
        kp, in_ch=in_ch, backbone_out=backbone_out, feat_size=feat_size,
        hidden=hidden, num_layers=num_layers, id_len=id_len,
        track_len=track_len, batch_in=batch_in, wh=wh)

    fwd = jax.jit(functools.partial(
        cleaving_forward, track_len=track_len, hidden=hidden,
        num_layers=num_layers, id_len=id_len))
    gru_f, gru_b, srh, pur = fwd(x, params)
    jax.block_until_ready((gru_f, gru_b, srh, pur))

    assert gru_f.shape == (batch_in, track_len, id_len)
    assert gru_b.shape == (batch_in, track_len, id_len)
    assert srh.shape == (batch_in, 2 * (track_len - 1))
    assert pur.shape == (batch_in, 2)
    print("KERNEL_OK")
</pallas_src>

<mosaic_0001>
module attributes {stable_mosaic.version = 11 : i64} {
  func.func @kernel(%arg0: memref<8x384xf32, #tpu.memory_space<vmem>>, %arg1: memref<384x32xf32, #tpu.memory_space<vmem>>, %arg2: memref<1x32xf32, #tpu.memory_space<vmem>>, %arg3: memref<32x48xf32, #tpu.memory_space<vmem>>, %arg4: memref<1x48xf32, #tpu.memory_space<vmem>>, %arg5: memref<32x48xf32, #tpu.memory_space<vmem>>, %arg6: memref<1x48xf32, #tpu.memory_space<vmem>>, %arg7: memref<32x96xf32, #tpu.memory_space<vmem>>, %arg8: memref<1x96xf32, #tpu.memory_space<vmem>>, %arg9: memref<32x48xf32, #tpu.memory_space<vmem>>, %arg10: memref<1x48xf32, #tpu.memory_space<vmem>>, %arg11: memref<32x48xf32, #tpu.memory_space<vmem>>, %arg12: memref<1x48xf32, #tpu.memory_space<vmem>>, %arg13: memref<32x96xf32, #tpu.memory_space<vmem>>, %arg14: memref<1x96xf32, #tpu.memory_space<vmem>>, %arg15: memref<16x16xf32, #tpu.memory_space<vmem>>, %arg16: memref<1x16xf32, #tpu.memory_space<vmem>>, %arg17: memref<7x7xf32, #tpu.memory_space<vmem>>, %arg18: memref<1x7xf32, #tpu.memory_space<vmem>>, %arg19: memref<7x14xf32, #tpu.memory_space<vmem>>, %arg20: memref<1x14xf32, #tpu.memory_space<vmem>>, %arg21: memref<7x2xf32, #tpu.memory_space<vmem>>, %arg22: memref<1x2xf32, #tpu.memory_space<vmem>>, %arg23: memref<16x16xf32, #tpu.memory_space<vmem>>, %arg24: memref<16x16xf32, #tpu.memory_space<vmem>>, %arg25: memref<2x14xf32, #tpu.memory_space<vmem>>, %arg26: memref<2x2xf32, #tpu.memory_space<vmem>>) attributes {dimension_semantics = [], scalar_prefetch = 0 : i64, scratch_operands = 0 : i64, tpu.core_type = #tpu.core_type<tc>} {
    %c0 = arith.constant 0 : index
    %c0_0 = arith.constant 0 : index
    %0 = vector.load %arg0[%c0, %c0_0] : memref<8x384xf32, #tpu.memory_space<vmem>>, vector<8x384xf32>
    %c0_1 = arith.constant 0 : index
    %c0_2 = arith.constant 0 : index
    %1 = vector.load %arg1[%c0_1, %c0_2] : memref<384x32xf32, #tpu.memory_space<vmem>>, vector<384x32xf32>
    %cst = arith.constant dense<0.000000e+00> : vector<8x32xf32>
    %2 = tpu.matmul %0, %1, %cst {dimension_numbers = #tpu.dot_dimension_numbers<[1], [0], [0], [1], [0, 0, 1, 1], [], []>} : vector<8x384xf32>, vector<384x32xf32>, vector<8x32xf32> -> vector<8x32xf32>
    %c0_3 = arith.constant 0 : index
    %c0_4 = arith.constant 0 : index
    %3 = vector.load %arg2[%c0_3, %c0_4] : memref<1x32xf32, #tpu.memory_space<vmem>>, vector<1x32xf32>
    %4 = vector.broadcast %3 : vector<1x32xf32> to vector<8x32xf32>
    %5 = arith.addf %2, %4 : vector<8x32xf32>
    %c0_5 = arith.constant 0 : index
    %c0_6 = arith.constant 0 : index
    %6 = vector.load %arg3[%c0_5, %c0_6] : memref<32x48xf32, #tpu.memory_space<vmem>>, vector<32x48xf32>
    %c0_7 = arith.constant 0 : index
    %c0_8 = arith.constant 0 : index
    %7 = vector.load %arg4[%c0_7, %c0_8] : memref<1x48xf32, #tpu.memory_space<vmem>>, vector<1x48xf32>
    %c0_9 = arith.constant 0 : index
    %c0_10 = arith.constant 0 : index
    %8 = vector.load %arg5[%c0_9, %c0_10] : memref<32x48xf32, #tpu.memory_space<vmem>>, vector<32x48xf32>
    %c0_11 = arith.constant 0 : index
    %c0_12 = arith.constant 0 : index
    %9 = vector.load %arg6[%c0_11, %c0_12] : memref<1x48xf32, #tpu.memory_space<vmem>>, vector<1x48xf32>
    %c0_13 = arith.constant 0 : index
    %c0_14 = arith.constant 0 : index
    %10 = vector.load %arg7[%c0_13, %c0_14] : memref<32x96xf32, #tpu.memory_space<vmem>>, vector<32x96xf32>
    %c0_15 = arith.constant 0 : index
    %c0_16 = arith.constant 0 : index
    %11 = vector.load %arg8[%c0_15, %c0_16] : memref<1x96xf32, #tpu.memory_space<vmem>>, vector<1x96xf32>
    %cst_17 = arith.constant dense<0.000000e+00> : vector<8x48xf32>
    %12 = tpu.matmul %5, %6, %cst_17 {dimension_numbers = #tpu.dot_dimension_numbers<[1], [0], [0], [1], [0, 0, 1, 1], [], []>} : vector<8x32xf32>, vector<32x48xf32>, vector<8x48xf32> -> vector<8x48xf32>
    %13 = vector.broadcast %7 : vector<1x48xf32> to vector<8x48xf32>
    %14 = arith.addf %12, %13 : vector<8x48xf32>
    %cst_18 = arith.constant dense<0.000000e+00> : vector<8x48xf32>
    %15 = tpu.matmul %5, %8, %cst_18 {dimension_numbers = #tpu.dot_dimension_numbers<[1], [0], [0], [1], [0, 0, 1, 1], [], []>} : vector<8x32xf32>, vector<32x48xf32>, vector<8x48xf32> -> vector<8x48xf32>
    %16 = vector.broadcast %9 : vector<1x48xf32> to vector<8x48xf32>
    %17 = arith.addf %15, %16 : vector<8x48xf32>
    %18 = vector.extract_strided_slice %14 {offsets = [0, 0], sizes = [8, 16], strides = [1, 1]} : vector<8x48xf32> to vector<8x16xf32>
    %19 = vector.extract_strided_slice %17 {offsets = [0, 0], sizes = [8, 16], strides = [1, 1]} : vector<8x48xf32> to vector<8x16xf32>
    %20 = vector.extract_strided_slice %14 {offsets = [0, 16], sizes = [8, 16], strides = [1, 1]} : vector<8x48xf32> to vector<8x16xf32>
    %21 = vector.extract_strided_slice %17 {offsets = [0, 16], sizes = [8, 16], strides = [1, 1]} : vector<8x48xf32> to vector<8x16xf32>
    %22 = vector.extract_strided_slice %14 {offsets = [0, 32], sizes = [8, 16], strides = [1, 1]} : vector<8x48xf32> to vector<8x16xf32>
    %23 = vector.extract_strided_slice %17 {offsets = [0, 32], sizes = [8, 16], strides = [1, 1]} : vector<8x48xf32> to vector<8x16xf32>
    %24 = tpu.concatenate %18, %19, %20, %21, %22, %23 in 1 : vector<8x16xf32>, vector<8x16xf32>, vector<8x16xf32>, vector<8x16xf32>, vector<8x16xf32>, vector<8x16xf32> -> vector<8x96xf32>
    %25 = vector.extract_strided_slice %14 {offsets = [0, 0], sizes = [8, 16], strides = [1, 1]} : vector<8x48xf32> to vector<8x16xf32>
    %26 = vector.extract_strided_slice %17 {offsets = [0, 0], sizes = [8, 16], strides = [1, 1]} : vector<8x48xf32> to vector<8x16xf32>
    %27 = vector.extract_strided_slice %14 {offsets = [0, 16], sizes = [8, 16], strides = [1, 1]} : vector<8x48xf32> to vector<8x16xf32>
    %28 = vector.extract_strided_slice %17 {offsets = [0, 16], sizes = [8, 16], strides = [1, 1]} : vector<8x48xf32> to vector<8x16xf32>
    %29 = vector.extract_strided_slice %14 {offsets = [0, 32], sizes = [8, 16], strides = [1, 1]} : vector<8x48xf32> to vector<8x16xf32>
    %30 = vector.extract_strided_slice %17 {offsets = [0, 32], sizes = [8, 16], strides = [1, 1]} : vector<8x48xf32> to vector<8x16xf32>
    %31 = tpu.concatenate %25, %26, %27, %28, %29, %30 in 1 : vector<8x16xf32>, vector<8x16xf32>, vector<8x16xf32>, vector<8x16xf32>, vector<8x16xf32>, vector<8x16xf32> -> vector<8x96xf32>
    %cst_19 = arith.constant 0.000000e+00 : f32
    %32 = vector.broadcast %cst_19 : f32 to vector<8x32xf32>
    %cst_20 = arith.constant dense<0.000000e+00> : vector<8x96xf32>
    %33 = tpu.matmul %32, %10, %cst_20 {dimension_numbers = #tpu.dot_dimension_numbers<[1], [0], [0], [1], [0, 0, 1, 1], [], []>} : vector<8x32xf32>, vector<32x96xf32>, vector<8x96xf32> -> vector<8x96xf32>
    %34 = vector.broadcast %11 : vector<1x96xf32> to vector<8x96xf32>
    %35 = arith.addf %33, %34 : vector<8x96xf32>
    %36 = vector.extract_strided_slice %24 {offsets = [0, 0], sizes = [8, 64], strides = [1, 1]} : vector<8x96xf32> to vector<8x64xf32>
    %37 = vector.extract_strided_slice %35 {offsets = [0, 0], sizes = [8, 64], strides = [1, 1]} : vector<8x96xf32> to vector<8x64xf32>
    %38 = arith.addf %36, %37 : vector<8x64xf32>
    %39 = arith.negf %38 : vector<8x64xf32>
    %40 = math.exp %39 : vector<8x64xf32>
    %cst_21 = arith.constant 1.000000e+00 : f32
    %41 = vector.broadcast %cst_21 : f32 to vector<8x64xf32>
    %42 = arith.addf %41, %40 : vector<8x64xf32>
    %43 = arith.divf %41, %42 : vector<8x64xf32>
    %44 = vector.extract_strided_slice %43 {offsets = [0, 0], sizes = [8, 32], strides = [1, 1]} : vector<8x64xf32> to vector<8x32xf32>
    %45 = vector.extract_strided_slice %43 {offsets = [0, 32], sizes = [8, 32], strides = [1, 1]} : vector<8x64xf32> to vector<8x32xf32>
    %46 = vector.extract_strided_slice %24 {offsets = [0, 64], sizes = [8, 32], strides = [1, 1]} : vector<8x96xf32> to vector<8x32xf32>
    %47 = vector.extract_strided_slice %35 {offsets = [0, 64], sizes = [8, 32], strides = [1, 1]} : vector<8x96xf32> to vector<8x32xf32>
    %48 = arith.mulf %44, %47 : vector<8x32xf32>
    %49 = arith.addf %46, %48 : vector<8x32xf32>
    %50 = math.tanh %49 : vector<8x32xf32>
    %cst_22 = arith.constant 1.000000e+00 : f32
    %51 = vector.broadcast %cst_22 : f32 to vector<8x32xf32>
    %52 = arith.subf %51, %45 : vector<8x32xf32>
    %53 = arith.subf %50, %32 : vector<8x32xf32>
    %54 = arith.mulf %52, %53 : vector<8x32xf32>
    %55 = arith.addf %32, %54 : vector<8x32xf32>
    %56 = vector.extract_strided_slice %55 {offsets = [0, 0], sizes = [8, 16], strides = [1, 1]} : vector<8x32xf32> to vector<8x16xf32>
    %57 = vector.extract_strided_slice %55 {offsets = [0, 16], sizes = [8, 16], strides = [1, 1]} : vector<8x32xf32> to vector<8x16xf32>
    %cst_23 = arith.constant dense<0.000000e+00> : vector<8x96xf32>
    %58 = tpu.matmul %55, %10, %cst_23 {dimension_numbers = #tpu.dot_dimension_numbers<[1], [0], [0], [1], [0, 0, 1, 1], [], []>} : vector<8x32xf32>, vector<32x96xf32>, vector<8x96xf32> -> vector<8x96xf32>
    %59 = vector.broadcast %11 : vector<1x96xf32> to vector<8x96xf32>
    %60 = arith.addf %58, %59 : vector<8x96xf32>
    %61 = vector.extract_strided_slice %31 {offsets = [0, 0], sizes = [8, 64], strides = [1, 1]} : vector<8x96xf32> to vector<8x64xf32>
    %62 = vector.extract_strided_slice %60 {offsets = [0, 0], sizes = [8, 64], strides = [1, 1]} : vector<8x96xf32> to vector<8x64xf32>
    %63 = arith.addf %61, %62 : vector<8x64xf32>
    %64 = arith.negf %63 : vector<8x64xf32>
    %65 = math.exp %64 : vector<8x64xf32>
    %cst_24 = arith.constant 1.000000e+00 : f32
    %66 = vector.broadcast %cst_24 : f32 to vector<8x64xf32>
    %67 = arith.addf %66, %65 : vector<8x64xf32>
    %68 = arith.divf %66, %67 : vector<8x64xf32>
    %69 = vector.extract_strided_slice %68 {offsets = [0, 0], sizes = [8, 32], strides = [1, 1]} : vector<8x64xf32> to vector<8x32xf32>
    %70 = vector.extract_strided_slice %68 {offsets = [0, 32], sizes = [8, 32], strides = [1, 1]} : vector<8x64xf32> to vector<8x32xf32>
    %71 = vector.extract_strided_slice %31 {offsets = [0, 64], sizes = [8, 32], strides = [1, 1]} : vector<8x96xf32> to vector<8x32xf32>
    %72 = vector.extract_strided_slice %60 {offsets = [0, 64], sizes = [8, 32], strides = [1, 1]} : vector<8x96xf32> to vector<8x32xf32>
    %73 = arith.mulf %69, %72 : vector<8x32xf32>
    %74 = arith.addf %71, %73 : vector<8x32xf32>
    %75 = math.tanh %74 : vector<8x32xf32>
    %cst_25 = arith.constant 1.000000e+00 : f32
    %76 = vector.broadcast %cst_25 : f32 to vector<8x32xf32>
    %77 = arith.subf %76, %70 : vector<8x32xf32>
    %78 = arith.subf %75, %55 : vector<8x32xf32>
    %79 = arith.mulf %77, %78 : vector<8x32xf32>
    %80 = arith.addf %55, %79 : vector<8x32xf32>
    %81 = vector.extract_strided_slice %80 {offsets = [0, 0], sizes = [8, 16], strides = [1, 1]} : vector<8x32xf32> to vector<8x16xf32>
    %82 = vector.extract_strided_slice %80 {offsets = [0, 16], sizes = [8, 16], strides = [1, 1]} : vector<8x32xf32> to vector<8x16xf32>
    %c0_26 = arith.constant 0 : index
    %c0_27 = arith.constant 0 : index
    %83 = vector.load %arg9[%c0_26, %c0_27] : memref<32x48xf32, #tpu.memory_space<vmem>>, vector<32x48xf32>
    %c0_28 = arith.constant 0 : index
    %c0_29 = arith.constant 0 : index
    %84 = vector.load %arg10[%c0_28, %c0_29] : memref<1x48xf32, #tpu.memory_space<vmem>>, vector<1x48xf32>
    %c0_30 = arith.constant 0 : index
    %c0_31 = arith.constant 0 : index
    %85 = vector.load %arg11[%c0_30, %c0_31] : memref<32x48xf32, #tpu.memory_space<vmem>>, vector<32x48xf32>
    %c0_32 = arith.constant 0 : index
    %c0_33 = arith.constant 0 : index
    %86 = vector.load %arg12[%c0_32, %c0_33] : memref<1x48xf32, #tpu.memory_space<vmem>>, vector<1x48xf32>
    %c0_34 = arith.constant 0 : index
    %c0_35 = arith.constant 0 : index
    %87 = vector.load %arg13[%c0_34, %c0_35] : memref<32x96xf32, #tpu.memory_space<vmem>>, vector<32x96xf32>
    %c0_36 = arith.constant 0 : index
    %c0_37 = arith.constant 0 : index
    %88 = vector.load %arg14[%c0_36, %c0_37] : memref<1x96xf32, #tpu.memory_space<vmem>>, vector<1x96xf32>
    %89 = tpu.concatenate %56, %82 in 1 : vector<8x16xf32>, vector<8x16xf32> -> vector<8x32xf32>
    %90 = tpu.concatenate %81, %57 in 1 : vector<8x16xf32>, vector<8x16xf32> -> vector<8x32xf32>
    %91 = tpu.concatenate %89, %90 in 0 : vector<8x32xf32>, vector<8x32xf32> -> vector<16x32xf32>
    %cst_38 = arith.constant dense<0.000000e+00> : vector<16x48xf32>
    %92 = tpu.matmul %91, %83, %cst_38 {dimension_numbers = #tpu.dot_dimension_numbers<[1], [0], [0], [1], [0, 0, 1, 1], [], []>} : vector<16x32xf32>, vector<32x48xf32>, vector<16x48xf32> -> vector<16x48xf32>
    %93 = vector.broadcast %84 : vector<1x48xf32> to vector<16x48xf32>
    %94 = arith.addf %92, %93 : vector<16x48xf32>
    %cst_39 = arith.constant dense<0.000000e+00> : vector<16x48xf32>
    %95 = tpu.matmul %91, %85, %cst_39 {dimension_numbers = #tpu.dot_dimension_numbers<[1], [0], [0], [1], [0, 0, 1, 1], [], []>} : vector<16x32xf32>, vector<32x48xf32>, vector<16x48xf32> -> vector<16x48xf32>
    %96 = vector.broadcast %86 : vector<1x48xf32> to vector<16x48xf32>
    %97 = arith.addf %95, %96 : vector<16x48xf32>
    %98 = vector.extract_strided_slice %94 {offsets = [0, 0], sizes = [8, 48], strides = [1, 1]} : vector<16x48xf32> to vector<8x48xf32>
    %99 = vector.extract_strided_slice %94 {offsets = [8, 0], sizes = [8, 48], strides = [1, 1]} : vector<16x48xf32> to vector<8x48xf32>
    %100 = vector.extract_strided_slice %97 {offsets = [0, 0], sizes = [8, 48], strides = [1, 1]} : vector<16x48xf32> to vector<8x48xf32>
    %101 = vector.extract_strided_slice %97 {offsets = [8, 0], sizes = [8, 48], strides = [1, 1]} : vector<16x48xf32> to vector<8x48xf32>
    %102 = vector.extract_strided_slice %98 {offsets = [0, 0], sizes = [8, 16], strides = [1, 1]} : vector<8x48xf32> to vector<8x16xf32>
    %103 = vector.extract_strided_slice %101 {offsets = [0, 0], sizes = [8, 16], strides = [1, 1]} : vector<8x48xf32> to vector<8x16xf32>
    %104 = vector.extract_strided_slice %98 {offsets = [0, 16], sizes = [8, 16], strides = [1, 1]} : vector<8x48xf32> to vector<8x16xf32>
    %105 = vector.extract_strided_slice %101 {offsets = [0, 16], sizes = [8, 16], strides = [1, 1]} : vector<8x48xf32> to vector<8x16xf32>
    %106 = vector.extract_strided_slice %98 {offsets = [0, 32], sizes = [8, 16], strides = [1, 1]} : vector<8x48xf32> to vector<8x16xf32>
    %107 = vector.extract_strided_slice %101 {offsets = [0, 32], sizes = [8, 16], strides = [1, 1]} : vector<8x48xf32> to vector<8x16xf32>
    %108 = tpu.concatenate %102, %103, %104, %105, %106, %107 in 1 : vector<8x16xf32>, vector<8x16xf32>, vector<8x16xf32>, vector<8x16xf32>, vector<8x16xf32>, vector<8x16xf32> -> vector<8x96xf32>
    %109 = vector.extract_strided_slice %99 {offsets = [0, 0], sizes = [8, 16], strides = [1, 1]} : vector<8x48xf32> to vector<8x16xf32>
    %110 = vector.extract_strided_slice %100 {offsets = [0, 0], sizes = [8, 16], strides = [1, 1]} : vector<8x48xf32> to vector<8x16xf32>
    %111 = vector.extract_strided_slice %99 {offsets = [0, 16], sizes = [8, 16], strides = [1, 1]} : vector<8x48xf32> to vector<8x16xf32>
    %112 = vector.extract_strided_slice %100 {offsets = [0, 16], sizes = [8, 16], strides = [1, 1]} : vector<8x48xf32> to vector<8x16xf32>
    %113 = vector.extract_strided_slice %99 {offsets = [0, 32], sizes = [8, 16], strides = [1, 1]} : vector<8x48xf32> to vector<8x16xf32>
    %114 = vector.extract_strided_slice %100 {offsets = [0, 32], sizes = [8, 16], strides = [1, 1]} : vector<8x48xf32> to vector<8x16xf32>
    %115 = tpu.concatenate %109, %110, %111, %112, %113, %114 in 1 : vector<8x16xf32>, vector<8x16xf32>, vector<8x16xf32>, vector<8x16xf32>, vector<8x16xf32>, vector<8x16xf32> -> vector<8x96xf32>
    %cst_40 = arith.constant 0.000000e+00 : f32
    %116 = vector.broadcast %cst_40 : f32 to vector<8x32xf32>
    %cst_41 = arith.constant dense<0.000000e+00> : vector<8x96xf32>
    %117 = tpu.matmul %116, %87, %cst_41 {dimension_numbers = #tpu.dot_dimension_numbers<[1], [0], [0], [1], [0, 0, 1, 1], [], []>} : vector<8x32xf32>, vector<32x96xf32>, vector<8x96xf32> -> vector<8x96xf32>
    %118 = vector.broadcast %88 : vector<1x96xf32> to vector<8x96xf32>
    %119 = arith.addf %117, %118 : vector<8x96xf32>
    %120 = vector.extract_strided_slice %108 {offsets = [0, 0], sizes = [8, 64], strides = [1, 1]} : vector<8x96xf32> to vector<8x64xf32>
    %121 = vector.extract_strided_slice %119 {offsets = [0, 0], sizes = [8, 64], strides = [1, 1]} : vector<8x96xf32> to vector<8x64xf32>
    %122 = arith.addf %120, %121 : vector<8x64xf32>
    %123 = arith.negf %122 : vector<8x64xf32>
    %124 = math.exp %123 : vector<8x64xf32>
    %cst_42 = arith.constant 1.000000e+00 : f32
    %125 = vector.broadcast %cst_42 : f32 to vector<8x64xf32>
    %126 = arith.addf %125, %124 : vector<8x64xf32>
    %127 = arith.divf %125, %126 : vector<8x64xf32>
    %128 = vector.extract_strided_slice %127 {offsets = [0, 0], sizes = [8, 32], strides = [1, 1]} : vector<8x64xf32> to vector<8x32xf32>
    %129 = vector.extract_strided_slice %127 {offsets = [0, 32], sizes = [8, 32], strides = [1, 1]} : vector<8x64xf32> to vector<8x32xf32>
    %130 = vector.extract_strided_slice %108 {offsets = [0, 64], sizes = [8, 32], strides = [1, 1]} : vector<8x96xf32> to vector<8x32xf32>
    %131 = vector.extract_strided_slice %119 {offsets = [0, 64], sizes = [8, 32], strides = [1, 1]} : vector<8x96xf32> to vector<8x32xf32>
    %132 = arith.mulf %128, %131 : vector<8x32xf32>
    %133 = arith.addf %130, %132 : vector<8x32xf32>
    %134 = math.tanh %133 : vector<8x32xf32>
    %cst_43 = arith.constant 1.000000e+00 : f32
    %135 = vector.broadcast %cst_43 : f32 to vector<8x32xf32>
    %136 = arith.subf %135, %129 : vector<8x32xf32>
    %137 = arith.subf %134, %116 : vector<8x32xf32>
    %138 = arith.mulf %136, %137 : vector<8x32xf32>
    %139 = arith.addf %116, %138 : vector<8x32xf32>
    %140 = vector.extract_strided_slice %139 {offsets = [0, 0], sizes = [8, 16], strides = [1, 1]} : vector<8x32xf32> to vector<8x16xf32>
    %141 = vector.extract_strided_slice %139 {offsets = [0, 16], sizes = [8, 16], strides = [1, 1]} : vector<8x32xf32> to vector<8x16xf32>
    %cst_44 = arith.constant dense<0.000000e+00> : vector<8x96xf32>
    %142 = tpu.matmul %139, %87, %cst_44 {dimension_numbers = #tpu.dot_dimension_numbers<[1], [0], [0], [1], [0, 0, 1, 1], [], []>} : vector<8x32xf32>, vector<32x96xf32>, vector<8x96xf32> -> vector<8x96xf32>
    %143 = vector.broadcast %88 : vector<1x96xf32> to vector<8x96xf32>
    %144 = arith.addf %142, %143 : vector<8x96xf32>
    %145 = vector.extract_strided_slice %115 {offsets = [0, 0], sizes = [8, 64], strides = [1, 1]} : vector<8x96xf32> to vector<8x64xf32>
    %146 = vector.extract_strided_slice %144 {offsets = [0, 0], sizes = [8, 64], strides = [1, 1]} : vector<8x96xf32> to vector<8x64xf32>
    %147 = arith.addf %145, %146 : vector<8x64xf32>
    %148 = arith.negf %147 : vector<8x64xf32>
    %149 = math.exp %148 : vector<8x64xf32>
    %cst_45 = arith.constant 1.000000e+00 : f32
    %150 = vector.broadcast %cst_45 : f32 to vector<8x64xf32>
    %151 = arith.addf %150, %149 : vector<8x64xf32>
    %152 = arith.divf %150, %151 : vector<8x64xf32>
    %153 = vector.extract_strided_slice %152 {offsets = [0, 0], sizes = [8, 32], strides = [1, 1]} : vector<8x64xf32> to vector<8x32xf32>
    %154 = vector.extract_strided_slice %152 {offsets = [0, 32], sizes = [8, 32], strides = [1, 1]} : vector<8x64xf32> to vector<8x32xf32>
    %155 = vector.extract_strided_slice %115 {offsets = [0, 64], sizes = [8, 32], strides = [1, 1]} : vector<8x96xf32> to vector<8x32xf32>
    %156 = vector.extract_strided_slice %144 {offsets = [0, 64], sizes = [8, 32], strides = [1, 1]} : vector<8x96xf32> to vector<8x32xf32>
    %157 = arith.mulf %153, %156 : vector<8x32xf32>
    %158 = arith.addf %155, %157 : vector<8x32xf32>
    %159 = math.tanh %158 : vector<8x32xf32>
    %cst_46 = arith.constant 1.000000e+00 : f32
    %160 = vector.broadcast %cst_46 : f32 to vector<8x32xf32>
    %161 = arith.subf %160, %154 : vector<8x32xf32>
    %162 = arith.subf %159, %139 : vector<8x32xf32>
    %163 = arith.mulf %161, %162 : vector<8x32xf32>
    %164 = arith.addf %139, %163 : vector<8x32xf32>
    %165 = vector.extract_strided_slice %164 {offsets = [0, 0], sizes = [8, 16], strides = [1, 1]} : vector<8x32xf32> to vector<8x16xf32>
    %166 = vector.extract_strided_slice %164 {offsets = [0, 16], sizes = [8, 16], strides = [1, 1]} : vector<8x32xf32> to vector<8x16xf32>
    %c0_47 = arith.constant 0 : index
    %c0_48 = arith.constant 0 : index
    %167 = vector.load %arg15[%c0_47, %c0_48] : memref<16x16xf32, #tpu.memory_space<vmem>>, vector<16x16xf32>
    %c0_49 = arith.constant 0 : index
    %c0_50 = arith.constant 0 : index
    %168 = vector.load %arg16[%c0_49, %c0_50] : memref<1x16xf32, #tpu.memory_space<vmem>>, vector<1x16xf32>
    %169 = tpu.concatenate %140, %165 in 0 : vector<8x16xf32>, vector<8x16xf32> -> vector<16x16xf32>
    %170 = tpu.concatenate %166, %141 in 0 : vector<8x16xf32>, vector<8x16xf32> -> vector<16x16xf32>
    %cst_51 = arith.constant dense<0.000000e+00> : vector<16x16xf32>
    %171 = tpu.matmul %169, %167, %cst_51 {dimension_numbers = #tpu.dot_dimension_numbers<[1], [0], [0], [1], [0, 0, 1, 1], [], []>} : vector<16x16xf32>, vector<16x16xf32>, vector<16x16xf32> -> vector<16x16xf32>
    %172 = vector.broadcast %168 : vector<1x16xf32> to vector<16x16xf32>
    %173 = arith.addf %171, %172 : vector<16x16xf32>
    %c0_52 = arith.constant 0 : index
    %c0_53 = arith.constant 0 : index
    %174 = vector.load %arg23[%c0_52, %c0_53] : memref<16x16xf32, #tpu.memory_space<vmem>>, vector<16x16xf32>
    tpu.vector_store %arg23[%c0_52, %c0_53], %173 {strides = array<i32>} : memref<16x16xf32, #tpu.memory_space<vmem>>, vector<16x16xf32>,
    %cst_54 = arith.constant dense<0.000000e+00> : vector<16x16xf32>
    %175 = tpu.matmul %170, %167, %cst_54 {dimension_numbers = #tpu.dot_dimension_numbers<[1], [0], [0], [1], [0, 0, 1, 1], [], []>} : vector<16x16xf32>, vector<16x16xf32>, vector<16x16xf32> -> vector<16x16xf32>
    %176 = vector.broadcast %168 : vector<1x16xf32> to vector<16x16xf32>
    %177 = arith.addf %175, %176 : vector<16x16xf32>
    %c0_55 = arith.constant 0 : index
    %c0_56 = arith.constant 0 : index
    %178 = vector.load %arg24[%c0_55, %c0_56] : memref<16x16xf32, #tpu.memory_space<vmem>>, vector<16x16xf32>
    tpu.vector_store %arg24[%c0_55, %c0_56], %177 {strides = array<i32>} : memref<16x16xf32, #tpu.memory_space<vmem>>, vector<16x16xf32>,
    %cst_57 = arith.constant 1.000000e+00 : f32
    %179 = vector.broadcast %cst_57 : f32 to vector<1x16xf32>
    %180 = vector.extract_strided_slice %140 {offsets = [1, 0], sizes = [7, 16], strides = [1, 1]} : vector<8x16xf32> to vector<7x16xf32>
    %181 = vector.extract_strided_slice %141 {offsets = [1, 0], sizes = [7, 16], strides = [1, 1]} : vector<8x16xf32> to vector<7x16xf32>
    %182 = arith.subf %180, %181 : vector<7x16xf32>
    %183 = arith.mulf %182, %182 : vector<7x16xf32>
    %cst_58 = arith.constant dense<0.000000e+00> : vector<1x7xf32>
    %184 = tpu.matmul %179, %183, %cst_58 {dimension_numbers = #tpu.dot_dimension_numbers<[1], [1], [0], [0], [0, 0, 1, 0], [], []>} : vector<1x16xf32>, vector<7x16xf32>, vector<1x7xf32> -> vector<1x7xf32>
    %185 = vector.extract_strided_slice %165 {offsets = [1, 0], sizes = [7, 16], strides = [1, 1]} : vector<8x16xf32> to vector<7x16xf32>
    %186 = vector.extract_strided_slice %166 {offsets = [1, 0], sizes = [7, 16], strides = [1, 1]} : vector<8x16xf32> to vector<7x16xf32>
    %187 = arith.subf %185, %186 : vector<7x16xf32>
    %188 = arith.mulf %187, %187 : vector<7x16xf32>
    %cst_59 = arith.constant dense<0.000000e+00> : vector<1x7xf32>
    %189 = tpu.matmul %179, %188, %cst_59 {dimension_numbers = #tpu.dot_dimension_numbers<[1], [1], [0], [0], [0, 0, 1, 0], [], []>} : vector<1x16xf32>, vector<7x16xf32>, vector<1x7xf32> -> vector<1x7xf32>
    %190 = tpu.concatenate %184, %189 in 0 : vector<1x7xf32>, vector<1x7xf32> -> vector<2x7xf32>
    %191 = math.sqrt %190 : vector<2x7xf32>
    %c0_60 = arith.constant 0 : index
    %c0_61 = arith.constant 0 : index
    %192 = vector.load %arg17[%c0_60, %c0_61] : memref<7x7xf32, #tpu.memory_space<vmem>>, vector<7x7xf32>
    %cst_62 = arith.constant dense<0.000000e+00> : vector<2x7xf32>
    %193 = tpu.matmul %191, %192, %cst_62 {dimension_numbers = #tpu.dot_dimension_numbers<[1], [0], [0], [1], [0, 0, 1, 1], [], []>} : vector<2x7xf32>, vector<7x7xf32>, vector<2x7xf32> -> vector<2x7xf32>
    %c0_63 = arith.constant 0 : index
    %c0_64 = arith.constant 0 : index
    %194 = vector.load %arg18[%c0_63, %c0_64] : memref<1x7xf32, #tpu.memory_space<vmem>>, vector<1x7xf32>
    %195 = vector.broadcast %194 : vector<1x7xf32> to vector<2x7xf32>
    %196 = arith.addf %193, %195 : vector<2x7xf32>
    %c0_65 = arith.constant 0 : index
    %c0_66 = arith.constant 0 : index
    %197 = vector.load %arg19[%c0_65, %c0_66] : memref<7x14xf32, #tpu.memory_space<vmem>>, vector<7x14xf32>
    %cst_67 = arith.constant dense<0.000000e+00> : vector<2x14xf32>
    %198 = tpu.matmul %196, %197, %cst_67 {dimension_numbers = #tpu.dot_dimension_numbers<[1], [0], [0], [1], [0, 0, 1, 1], [], []>} : vector<2x7xf32>, vector<7x14xf32>, vector<2x14xf32> -> vector<2x14xf32>
    %c0_68 = arith.constant 0 : index
    %c0_69 = arith.constant 0 : index
    %199 = vector.load %arg20[%c0_68, %c0_69] : memref<1x14xf32, #tpu.memory_space<vmem>>, vector<1x14xf32>
    %200 = vector.broadcast %199 : vector<1x14xf32> to vector<2x14xf32>
    %201 = arith.addf %198, %200 : vector<2x14xf32>
    %202 = arith.negf %201 : vector<2x14xf32>
    %203 = math.exp %202 : vector<2x14xf32>
    %cst_70 = arith.constant 1.000000e+00 : f32
    %204 = vector.broadcast %cst_70 : f32 to vector<2x14xf32>
    %205 = arith.addf %204, %203 : vector<2x14xf32>
    %206 = arith.divf %204, %205 : vector<2x14xf32>
    %c0_71 = arith.constant 0 : index
    %c0_72 = arith.constant 0 : index
    %207 = vector.load %arg25[%c0_71, %c0_72] : memref<2x14xf32, #tpu.memory_space<vmem>>, vector<2x14xf32>
    tpu.vector_store %arg25[%c0_71, %c0_72], %206 {strides = array<i32>} : memref<2x14xf32, #tpu.memory_space<vmem>>, vector<2x14xf32>,
    %c0_73 = arith.constant 0 : index
    %c0_74 = arith.constant 0 : index
    %208 = vector.load %arg21[%c0_73, %c0_74] : memref<7x2xf32, #tpu.memory_space<vmem>>, vector<7x2xf32>
    %cst_75 = arith.constant dense<0.000000e+00> : vector<2x2xf32>
    %209 = tpu.matmul %191, %208, %cst_75 {dimension_numbers = #tpu.dot_dimension_numbers<[1], [0], [0], [1], [0, 0, 1, 1], [], []>} : vector<2x7xf32>, vector<7x2xf32>, vector<2x2xf32> -> vector<2x2xf32>
    %c0_76 = arith.constant 0 : index
    %c0_77 = arith.constant 0 : index
    %210 = vector.load %arg22[%c0_76, %c0_77] : memref<1x2xf32, #tpu.memory_space<vmem>>, vector<1x2xf32>
    %211 = vector.broadcast %210 : vector<1x2xf32> to vector<2x2xf32>
    %212 = arith.addf %209, %211 : vector<2x2xf32>
    %213 = arith.negf %212 : vector<2x2xf32>
    %214 = math.exp %213 : vector<2x2xf32>
    %cst_78 = arith.constant 1.000000e+00 : f32
    %215 = vector.broadcast %cst_78 : f32 to vector<2x2xf32>
    %216 = arith.addf %215, %214 : vector<2x2xf32>
    %217 = arith.divf %215, %216 : vector<2x2xf32>
    %c0_79 = arith.constant 0 : index
    %c0_80 = arith.constant 0 : index
    %218 = vector.load %arg26[%c0_79, %c0_80] : memref<2x2xf32, #tpu.memory_space<vmem>>, vector<2x2xf32>
    tpu.vector_store %arg26[%c0_79, %c0_80], %217 {strides = array<i32>} : memref<2x2xf32, #tpu.memory_space<vmem>>, vector<2x2xf32>,
    return
  }
}

</mosaic_0001>

<llo_original>
// kernel: cleaving_forward.1
$region0: #{cleaving_forward.1}
  #allocation0 [shape = 'u32[]', space=smem, size = 0x4, offset = 0x4, fixed_abs, tag = 'smem constant byte address 0x4 - core index']
  #allocation1 [shape = 'u32[144,128]{1,0:T(1,128)}', space=vmem, size = 0x12000, scoped, tag = 'internal scratch']
  %s0 = inlined_call_operand.vmem [shape: f32[8,384], index: 0, kind: input, shape index: {}]
  %s1 = inlined_call_operand.vmem [shape: f32[384,32], index: 1, kind: input, shape index: {}]
  %s2 = inlined_call_operand.vmem [shape: f32[1,32], index: 2, kind: input, shape index: {}]
  %s3 = inlined_call_operand.vmem [shape: f32[32,48], index: 3, kind: input, shape index: {}]
  %s4 = inlined_call_operand.vmem [shape: f32[1,48], index: 4, kind: input, shape index: {}]
  %s5 = inlined_call_operand.vmem [shape: f32[32,48], index: 5, kind: input, shape index: {}]
  %s6 = inlined_call_operand.vmem [shape: f32[1,48], index: 6, kind: input, shape index: {}]
  %s7 = inlined_call_operand.vmem [shape: f32[32,96], index: 7, kind: input, shape index: {}]
  %s8 = inlined_call_operand.vmem [shape: f32[1,96], index: 8, kind: input, shape index: {}]
  %s9 = inlined_call_operand.vmem [shape: f32[32,48], index: 9, kind: input, shape index: {}]
  %s10 = inlined_call_operand.vmem [shape: f32[1,48], index: 10, kind: input, shape index: {}]
  %s11 = inlined_call_operand.vmem [shape: f32[32,48], index: 11, kind: input, shape index: {}]
  %s12 = inlined_call_operand.vmem [shape: f32[1,48], index: 12, kind: input, shape index: {}]
  %s13 = inlined_call_operand.vmem [shape: f32[32,96], index: 13, kind: input, shape index: {}]
  %s14 = inlined_call_operand.vmem [shape: f32[1,96], index: 14, kind: input, shape index: {}]
  %s15 = inlined_call_operand.vmem [shape: f32[16,16], index: 15, kind: input, shape index: {}]
  %s16 = inlined_call_operand.vmem [shape: f32[1,16], index: 16, kind: input, shape index: {}]
  %s17 = inlined_call_operand.vmem [shape: f32[7,7], index: 17, kind: input, shape index: {}]
  %s18 = inlined_call_operand.vmem [shape: f32[1,7], index: 18, kind: input, shape index: {}]
  %s19 = inlined_call_operand.vmem [shape: f32[7,14], index: 19, kind: input, shape index: {}]
  %s20 = inlined_call_operand.vmem [shape: f32[1,14], index: 20, kind: input, shape index: {}]
  %s21 = inlined_call_operand.vmem [shape: f32[7,2], index: 21, kind: input, shape index: {}]
  %s22 = inlined_call_operand.vmem [shape: f32[1,2], index: 22, kind: input, shape index: {}]
  %s23 = inlined_call_operand.hbm [shape: f32[16,16], index: 23, kind: output, shape index: {0}]
  %s24 = inlined_call_operand.hbm [shape: f32[16,16], index: 24, kind: output, shape index: {1}]
  %s25 = inlined_call_operand.hbm [shape: f32[2,14], index: 25, kind: output, shape index: {2}]
  %s26 = inlined_call_operand.hbm [shape: f32[2,2], index: 26, kind: output, shape index: {3}]
  %27 = xla_tuple %s23, %s24, %s25, %s26
  %s28 = sld [smem:[#allocation0]]
  $region126: #{cleaving_forward.1} parent=0
    _
  %s30 = ssub.s32 1, %s28
  %s31 = scalar_select 0, %s30, %s28
  $region1: #{cleaving_forward.1} parent=0
    #allocation2 [shape = 'u8[8192]{0}', space=vmem, size = 0x2000, scoped, tag = 'output window, operand 0, single buffered']
    #allocation3 [shape = 's32[1]{0}', space=sflag, size = 0x4, scoped, tag = 'scoped memory for cleaving_forward.1']
    #allocation4 [shape = 'u8[8192]{0}', space=vmem, size = 0x2000, scoped, tag = 'output window, operand 1, single buffered']
    #allocation5 [shape = 's32[1]{0}', space=sflag, size = 0x4, scoped, tag = 'scoped memory for cleaving_forward.1']
    #allocation6 [shape = 'u8[1024]{0}', space=vmem, size = 0x400, scoped, tag = 'output window, operand 2, single buffered']
    #allocation7 [shape = 'u8[1024]{0}', space=vmem, size = 0x400, scoped, tag = 'output window, operand 3, single buffered']
    #allocation8 [shape = 's32[1]{0}', space=sflag, size = 0x4, scoped, tag = 'scoped memory for cleaving_forward.1']
    %32 = vsyncpa [#allocation3], 0
    %33 = vsyncpa [#allocation5], 0
    %34 = vsyncpa [#allocation8], 0
    // Predicated region
    $region2: #{cleaving_forward.1} parent=1 // pred_check
      _
    $region3: #{cleaving_forward.1} parent=1 // pred_check_branch
      %36 = sbr.rel (0) target = $region5
    $region4: #{cleaving_forward.1} parent=1 // pred_region
      _
    $region5: #{cleaving_forward.1} parent=1 // pred_fallthru
      _
    // Predicated region
    $region6: #{cleaving_forward.1} parent=1 // pred_check
      _
    $region7: #{cleaving_forward.1} parent=1 // pred_check_branch
      %38 = sbr.rel (0) target = $region9
    $region8: #{cleaving_forward.1} parent=1 // pred_region
      _
    $region9: #{cleaving_forward.1} parent=1 // pred_fallthru
      _
    // Predicated region
    $region10: #{cleaving_forward.1} parent=1 // pred_check
      _
    $region11: #{cleaving_forward.1} parent=1 // pred_check_branch
      %40 = sbr.rel (0) target = $region13
    $region12: #{cleaving_forward.1} parent=1 // pred_region
      _
    $region13: #{cleaving_forward.1} parent=1 // pred_fallthru
      _
    // Predicated region
    $region14: #{cleaving_forward.1} parent=1 // pred_check
      _
    $region15: #{cleaving_forward.1} parent=1 // pred_check_branch
      %42 = sbr.rel (0) target = $region17
    $region16: #{cleaving_forward.1} parent=1 // pred_region
      _
    $region17: #{cleaving_forward.1} parent=1 // pred_fallthru
      _
    // Predicated region
    $region18: #{cleaving_forward.1} parent=1 // pred_check
      _
    $region19: #{cleaving_forward.1} parent=1 // pred_check_branch
      %44 = sbr.rel (0) target = $region21
    $region20: #{cleaving_forward.1} parent=1 // pred_region
      _
    $region21: #{cleaving_forward.1} parent=1 // pred_fallthru
      _
    // Predicated region
    $region22: #{cleaving_forward.1} parent=1 // pred_check
      _
    $region23: #{cleaving_forward.1} parent=1 // pred_check_branch
      %46 = sbr.rel (0) target = $region25
    $region24: #{cleaving_forward.1} parent=1 // pred_region
      _
    $region25: #{cleaving_forward.1} parent=1 // pred_fallthru
      _
    // Predicated region
    $region26: #{cleaving_forward.1} parent=1 // pred_check
      _
    $region27: #{cleaving_forward.1} parent=1 // pred_check_branch
      %48 = sbr.rel (0) target = $region29
    $region28: #{cleaving_forward.1} parent=1 // pred_region
      _
    $region29: #{cleaving_forward.1} parent=1 // pred_fallthru
      _
    // Predicated region
    $region30: #{cleaving_forward.1} parent=1 // pred_check
      _
    $region31: #{cleaving_forward.1} parent=1 // pred_check_branch
      %50 = sbr.rel (0) target = $region33
    $region32: #{cleaving_forward.1} parent=1 // pred_region
      _
    $region33: #{cleaving_forward.1} parent=1 // pred_fallthru
      _
    // Predicated region
    $region34: #{cleaving_forward.1} parent=1 // pred_check
      _
    $region35: #{cleaving_forward.1} parent=1 // pred_check_branch
      %52 = sbr.rel (0) target = $region37
    $region36: #{cleaving_forward.1} parent=1 // pred_region
      _
    $region37: #{cleaving_forward.1} parent=1 // pred_fallthru
      _
    // Predicated region
    $region38: #{cleaving_forward.1} parent=1 // pred_check
      _
    $region39: #{cleaving_forward.1} parent=1 // pred_check_branch
      %54 = sbr.rel (0) target = $region41
    $region40: #{cleaving_forward.1} parent=1 // pred_region
      _
    $region41: #{cleaving_forward.1} parent=1 // pred_fallthru
      _
    // Predicated region
    $region42: #{cleaving_forward.1} parent=1 // pred_check
      _
    $region43: #{cleaving_forward.1} parent=1 // pred_check_branch
      %56 = sbr.rel (0) target = $region45
    $region44: #{cleaving_forward.1} parent=1 // pred_region
      _
    $region45: #{cleaving_forward.1} parent=1 // pred_fallthru
      _
    // Predicated region
    $region46: #{cleaving_forward.1} parent=1 // pred_check
      _
    $region47: #{cleaving_forward.1} parent=1 // pred_check_branch
      %58 = sbr.rel (0) target = $region49
    $region48: #{cleaving_forward.1} parent=1 // pred_region
      _
    $region49: #{cleaving_forward.1} parent=1 // pred_fallthru
      _
    // Predicated region
    $region50: #{cleaving_forward.1} parent=1 // pred_check
      _
    $region51: #{cleaving_forward.1} parent=1 // pred_check_branch
      %60 = sbr.rel (0) target = $region53
    $region52: #{cleaving_forward.1} parent=1 // pred_region
      _
    $region53: #{cleaving_forward.1} parent=1 // pred_fallthru
      _
    // Predicated region
    $region54: #{cleaving_forward.1} parent=1 // pred_check
      _
    $region55: #{cleaving_forward.1} parent=1 // pred_check_branch
      %62 = sbr.rel (0) target = $region57
    $region56: #{cleaving_forward.1} parent=1 // pred_region
      _
    $region57: #{cleaving_forward.1} parent=1 // pred_fallthru
      _
    // Predicated region
    $region58: #{cleaving_forward.1} parent=1 // pred_check
      _
    $region59: #{cleaving_forward.1} parent=1 // pred_check_branch
      %64 = sbr.rel (0) target = $region61
    $region60: #{cleaving_forward.1} parent=1 // pred_region
      _
    $region61: #{cleaving_forward.1} parent=1 // pred_fallthru
      _
    // Predicated region
    $region62: #{cleaving_forward.1} parent=1 // pred_check
      _
    $region63: #{cleaving_forward.1} parent=1 // pred_check_branch
      %66 = sbr.rel (0) target = $region65
    $region64: #{cleaving_forward.1} parent=1 // pred_region
      _
    $region65: #{cleaving_forward.1} parent=1 // pred_fallthru
      _
    // Predicated region
    $region66: #{cleaving_forward.1} parent=1 // pred_check
      _
    $region67: #{cleaving_forward.1} parent=1 // pred_check_branch
      %68 = sbr.rel (0) target = $region69
    $region68: #{cleaving_forward.1} parent=1 // pred_region
      _
    $region69: #{cleaving_forward.1} parent=1 // pred_fallthru
      _
    // Predicated region
    $region70: #{cleaving_forward.1} parent=1 // pred_check
      _
    $region71: #{cleaving_forward.1} parent=1 // pred_check_branch
      %70 = sbr.rel (0) target = $region73
    $region72: #{cleaving_forward.1} parent=1 // pred_region
      _
    $region73: #{cleaving_forward.1} parent=1 // pred_fallthru
      _
    // Predicated region
    $region74: #{cleaving_forward.1} parent=1 // pred_check
      _
    $region75: #{cleaving_forward.1} parent=1 // pred_check_branch
      %72 = sbr.rel (0) target = $region77
    $region76: #{cleaving_forward.1} parent=1 // pred_region
      _
    $region77: #{cleaving_forward.1} parent=1 // pred_fallthru
      _
    // Predicated region
    $region78: #{cleaving_forward.1} parent=1 // pred_check
      _
    $region79: #{cleaving_forward.1} parent=1 // pred_check_branch
      %74 = sbr.rel (0) target = $region81
    $region80: #{cleaving_forward.1} parent=1 // pred_region
      _
    $region81: #{cleaving_forward.1} parent=1 // pred_fallthru
      _
    // Predicated region
    $region82: #{cleaving_forward.1} parent=1 // pred_check
      _
    $region83: #{cleaving_forward.1} parent=1 // pred_check_branch
      %76 = sbr.rel (0) target = $region85
    $region84: #{cleaving_forward.1} parent=1 // pred_region
      _
    $region85: #{cleaving_forward.1} parent=1 // pred_fallthru
      _
    // Predicated region
    $region86: #{cleaving_forward.1} parent=1 // pred_check
      _
    $region87: #{cleaving_forward.1} parent=1 // pred_check_branch
      %78 = sbr.rel (0) target = $region89
    $region88: #{cleaving_forward.1} parent=1 // pred_region
      _
    $region89: #{cleaving_forward.1} parent=1 // pred_fallthru
      _
    // Predicated region
    $region90: #{cleaving_forward.1} parent=1 // pred_check
      _
    $region91: #{cleaving_forward.1} parent=1 // pred_check_branch
      %80 = sbr.rel (0) target = $region93
    $region92: #{cleaving_forward.1} parent=1 // pred_region
      _
    $region93: #{cleaving_forward.1} parent=1 // pred_fallthru
      _
    %v81 = vld [vmem:[%s0] sm:$0xff]
    %v82 = vld [vmem:[%s0 + $0x8] sm:$0xff]
    %v83 = vld [vmem:[%s0 + $0x10] sm:$0xff]
    %v84 = vld [vmem:[%s1] sm:$0xff]
    %v85 = vld [vmem:[%s1 + $0x8] sm:$0xff]
    %v86 = vld [vmem:[%s1 + $0x10] sm:$0xff]
    %v87 = vld [vmem:[%s1 + $0x18] sm:$0xff]
    %v88 = vld [vmem:[%s1 + $0x20] sm:$0xff]
    %v89 = vld [vmem:[%s1 + $0x28] sm:$0xff]
    %v90 = vld [vmem:[%s1 + $0x30] sm:$0xff]
    %v91 = vld [vmem:[%s1 + $0x38] sm:$0xff]
    %v92 = vld [vmem:[%s1 + $0x40] sm:$0xff]
    %v93 = vld [vmem:[%s1 + $0x48] sm:$0xff]
    %v94 = vld [vmem:[%s1 + $0x50] sm:$0xff]
    %v95 = vld [vmem:[%s1 + $0x58] sm:$0xff]
    %v96 = vld [vmem:[%s1 + $0x60] sm:$0xff]
    %v97 = vld [vmem:[%s1 + $0x68] sm:$0xff]
    %v98 = vld [vmem:[%s1 + $0x70] sm:$0xff]
    %v99 = vld [vmem:[%s1 + $0x78] sm:$0xff]
    %v100 = vld [vmem:[%s1 + $0x80] sm:$0xff]
    %v101 = vld [vmem:[%s1 + $0x88] sm:$0xff]
    %v102 = vld [vmem:[%s1 + $0x90] sm:$0xff]
    %v103 = vld [vmem:[%s1 + $0x98] sm:$0xff]
    %v104 = vld [vmem:[%s1 + $0xa0] sm:$0xff]
    %v105 = vld [vmem:[%s1 + $0xa8] sm:$0xff]
    %v106 = vld [vmem:[%s1 + $0xb0] sm:$0xff]
    %v107 = vld [vmem:[%s1 + $0xb8] sm:$0xff]
    %v108 = vld [vmem:[%s1 + $0xc0] sm:$0xff]
    %v109 = vld [vmem:[%s1 + $0xc8] sm:$0xff]
    %v110 = vld [vmem:[%s1 + $0xd0] sm:$0xff]
    %v111 = vld [vmem:[%s1 + $0xd8] sm:$0xff]
    %v112 = vld [vmem:[%s1 + $0xe0] sm:$0xff]
    %v113 = vld [vmem:[%s1 + $0xe8] sm:$0xff]
    %v114 = vld [vmem:[%s1 + $0xf0] sm:$0xff]
    %v115 = vld [vmem:[%s1 + $0xf8] sm:$0xff]
    %v116 = vld [vmem:[%s1 + $0x100] sm:$0xff]
    %v117 = vld [vmem:[%s1 + $0x108] sm:$0xff]
    %v118 = vld [vmem:[%s1 + $0x110] sm:$0xff]
    %v119 = vld [vmem:[%s1 + $0x118] sm:$0xff]
    %v120 = vld [vmem:[%s1 + $0x120] sm:$0xff]
    %v121 = vld [vmem:[%s1 + $0x128] sm:$0xff]
    %v122 = vld [vmem:[%s1 + $0x130] sm:$0xff]
    %v123 = vld [vmem:[%s1 + $0x138] sm:$0xff]
    %v124 = vld [vmem:[%s1 + $0x140] sm:$0xff]
    %v125 = vld [vmem:[%s1 + $0x148] sm:$0xff]
    %v126 = vld [vmem:[%s1 + $0x150] sm:$0xff]
    %v127 = vld [vmem:[%s1 + $0x158] sm:$0xff]
    %v128 = vld [vmem:[%s1 + $0x160] sm:$0xff]
    %v129 = vld [vmem:[%s1 + $0x168] sm:$0xff]
    %v130 = vld [vmem:[%s1 + $0x170] sm:$0xff]
    %v131 = vld [vmem:[%s1 + $0x178] sm:$0xff]
    %v132 = vld [vmem:[%s2] sm:$0x1]
    %v134 = vlaneseq
    %v135 = vshrl.u32 %v134, 7
    %v136 = vsub.s32 0, %v135
    %v137 = vrot.slane %v132, %v136
    %139 = vmatprep.subr.mxu0 0.0
    %140 = vmatpush1.msra.mxu0 %v84
    %141 = vmatprep.subr.mxu0 0.0
    %142 = vmatpush1.msra.mxu0 %v85
    %143 = vmatprep.subr.mxu0 0.0
    %144 = vmatpush1.msra.mxu0 %v86
    %145 = vmatprep.subr.mxu0 0.0
    %146 = vmatpush1.msra.mxu0 %v87
    %147 = vmatprep.subr.mxu0 0.0
    %148 = vmatpush1.msra.mxu0 %v88
    %149 = vmatprep.subr.mxu0 0.0
    %150 = vmatpush1.msra.mxu0 %v89
    %151 = vmatprep.subr.mxu0 0.0
    %152 = vmatpush1.msra.mxu0 %v90
    %153 = vmatprep.subr.mxu0 0.0
    %154 = vmatpush1.msra.mxu0 %v91
    %155 = vmatprep.subr.mxu0 0.0
    %156 = vmatpush1.msra.mxu0 %v92
    %157 = vmatprep.subr.mxu0 0.0
    %158 = vmatpush1.msra.mxu0 %v93
    %159 = vmatprep.subr.mxu0 0.0
    %160 = vmatpush1.msra.mxu0 %v94
    %161 = vmatprep.subr.mxu0 0.0
    %162 = vmatpush1.msra.mxu0 %v95
    %163 = vmatprep.subr.mxu0 0.0
    %164 = vmatpush1.msra.mxu0 %v96
    %165 = vmatprep.subr.mxu0 0.0
    %166 = vmatpush1.msra.mxu0 %v97
    %167 = vmatprep.subr.mxu0 0.0
    %168 = vmatpush1.msra.mxu0 %v98
    %169 = vmatprep.subr.mxu0 0.0
    %170 = vmatpush1.msra.mxu0 %v99
    %171 = vmatprep.subr.mxu0 0.0
    %172 = vmatpush1.msra.mxu0 %v100
    %173 = vmatprep.subr.mxu0 0.0
    %174 = vmatpush1.msra.mxu0 %v101
    %175 = vmatprep.subr.mxu0 0.0
    %176 = vmatpush1.msra.mxu0 %v102
    %177 = vmatprep.subr.mxu0 0.0
    %178 = vmatpush1.msra.mxu0 %v103
    %179 = vmatprep.subr.mxu0 0.0
    %180 = vmatpush1.msra.mxu0 %v104
    %181 = vmatprep.subr.mxu0 0.0
    %182 = vmatpush1.msra.mxu0 %v105
    %183 = vmatprep.subr.mxu0 0.0
    %184 = vmatpush1.msra.mxu0 %v106
    %185 = vmatprep.subr.mxu0 0.0
    %186 = vmatpush1.msra.mxu0 %v107
    %187 = vmatprep.subr.mxu0 0.0
    %188 = vmatpush1.msra.mxu0 %v108
    %189 = vmatprep.subr.mxu0 0.0
    %190 = vmatpush1.msra.mxu0 %v109
    %191 = vmatprep.subr.mxu0 0.0
    %192 = vmatpush1.msra.mxu0 %v110
    %193 = vmatprep.subr.mxu0 0.0
    %194 = vmatpush1.msra.mxu0 %v111
    %195 = vmatprep.subr.mxu0 0.0
    %196 = vmatpush1.msra.mxu0 %v112
    %197 = vmatprep.subr.mxu0 0.0
    %198 = vmatpush1.msra.mxu0 %v113
    %199 = vmatprep.subr.mxu0 0.0
    %200 = vmatpush1.msra.mxu0 %v114
    %201 = vmatprep.subr.mxu0 0.0
    %202 = vmatpush1.msra.mxu0 %v115
    %203 = vmatprep.mubr.f32.mxu0 %v82
    %204 = vmatmul.mubr.f32.gmra.mrb[0].mxu0 %v81
    %v205 = vpop.f32.mrb[0].mxu0
    %v206 = vadd.f32 %v137, %v205
    %v207 = vpop.f32.mrb[0].mxu0
    %208 = vdwg.mxu0
    %209 = vmatprep.subr.mxu0 0.0
    %210 = vmatpush1.msra.mxu0 %v116
    %211 = vmatprep.subr.mxu0 0.0
    %212 = vmatpush1.msra.mxu0 %v117
    %213 = vmatprep.subr.mxu0 0.0
    %214 = vmatpush1.msra.mxu0 %v118
    %215 = vmatprep.subr.mxu0 0.0
    %216 = vmatpush1.msra.mxu0 %v119
    %217 = vmatprep.subr.mxu0 0.0
    %218 = vmatpush1.msra.mxu0 %v120
    %219 = vmatprep.subr.mxu0 0.0
    %220 = vmatpush1.msra.mxu0 %v121
    %221 = vmatprep.subr.mxu0 0.0
    %222 = vmatpush1.msra.mxu0 %v122
    %223 = vmatprep.subr.mxu0 0.0
    %224 = vmatpush1.msra.mxu0 %v123
    %225 = vmatprep.subr.mxu0 0.0
    %226 = vmatpush1.msra.mxu0 %v124
    %227 = vmatprep.subr.mxu0 0.0
    %228 = vmatpush1.msra.mxu0 %v125
    %229 = vmatprep.subr.mxu0 0.0
    %230 = vmatpush1.msra.mxu0 %v126
    %231 = vmatprep.subr.mxu0 0.0
    %232 = vmatpush1.msra.mxu0 %v127
    %233 = vmatprep.subr.mxu0 0.0
    %234 = vmatpush1.msra.mxu0 %v128
    %235 = vmatprep.subr.mxu0 0.0
    %236 = vmatpush1.msra.mxu0 %v129
    %237 = vmatprep.subr.mxu0 0.0
    %238 = vmatpush1.msra.mxu0 %v130
    %239 = vmatprep.subr.mxu0 0.0
    %240 = vmatpush1.msra.mxu0 %v131
    %241 = vmatprep.subr.mxu0 0.0
    %242 = vmatpush1.msra.mxu0 0.0
    %243 = vmatprep.subr.mxu0 0.0
    %244 = vmatpush1.msra.mxu0 0.0
    %245 = vmatprep.subr.mxu0 0.0
    %246 = vmatpush1.msra.mxu0 0.0
    %247 = vmatprep.subr.mxu0 0.0
    %248 = vmatpush1.msra.mxu0 0.0
    %249 = vmatprep.subr.mxu0 0.0
    %250 = vmatpush1.msra.mxu0 0.0
    %251 = vmatprep.subr.mxu0 0.0
    %252 = vmatpush1.msra.mxu0 0.0
    %253 = vmatprep.subr.mxu0 0.0
    %254 = vmatpush1.msra.mxu0 0.0
    %255 = vmatprep.subr.mxu0 0.0
    %256 = vmatpush1.msra.mxu0 0.0
    %257 = vmatprep.subr.mxu0 0.0
    %258 = vmatpush1.msra.mxu0 0.0
    %259 = vmatprep.subr.mxu0 0.0
    %260 = vmatpush1.msra.mxu0 0.0
    %261 = vmatprep.subr.mxu0 0.0
    %262 = vmatpush1.msra.mxu0 0.0
    %263 = vmatprep.subr.mxu0 0.0
    %264 = vmatpush1.msra.mxu0 0.0
    %265 = vmatprep.subr.mxu0 0.0
    %266 = vmatpush1.msra.mxu0 0.0
    %267 = vmatprep.subr.mxu0 0.0
    %268 = vmatpush1.msra.mxu0 0.0
    %269 = vmatprep.subr.mxu0 0.0
    %270 = vmatpush1.msra.mxu0 0.0
    %271 = vmatprep.subr.mxu0 0.0
    %272 = vmatpush1.msra.mxu0 0.0
    %273 = vmatprep.mubr.f32.mxu0 0.0
    %274 = vmatmul.mubr.f32.gmra.mrb[0].mxu0 %v83
    %v275 = vpop.f32.mrb[0].mxu0
    %v276 = vadd.f32 %v206, %v275
    %v277 = vpop.f32.mrb[0].mxu0
    %278 = vdwg.mxu0
    %v279 = vld [vmem:[%s3] sm:$0xff]
    %v280 = vld [vmem:[%s3 + $0x8] sm:$0xff]
    %v281 = vld [vmem:[%s3 + $0x10] sm:$0xff]
    %v282 = vld [vmem:[%s3 + $0x18] sm:$0xff]
    %v283 = vld [vmem:[%s4] sm:$0x1]
    %v284 = vld [vmem:[%s5] sm:$0xff]
    %v285 = vld [vmem:[%s5 + $0x8] sm:$0xff]
    %v286 = vld [vmem:[%s5 + $0x10] sm:$0xff]
    %v287 = vld [vmem:[%s5 + $0x18] sm:$0xff]
    %v288 = vld [vmem:[%s6] sm:$0x1]
    %v289 = vld [vmem:[%s7] sm:$0xff]
    %v290 = vld [vmem:[%s7 + $0x8] sm:$0xff]
    %v291 = vld [vmem:[%s7 + $0x10] sm:$0xff]
    %v292 = vld [vmem:[%s7 + $0x18] sm:$0xff]
    %v293 = vld [vmem:[%s8] sm:$0x1]
    %v295 = vlaneseq
    %v296 = vshrl.u32 %v295, 7
    %v297 = vsub.s32 0, %v296
    %v298 = vrot.slane %v283, %v297
    %vm300 = vcmask 261120
    %v302 = vsel %vm300, %v276, 0
    %304 = vmatprep.subr.mxu0 0.0
    %305 = vmatpush1.msra.mxu0 %v279
    %306 = vmatprep.subr.mxu0 0.0
    %307 = vmatpush1.msra.mxu0 %v280
    %308 = vmatprep.subr.mxu0 0.0
    %309 = vmatpush1.msra.mxu0 %v281
    %310 = vmatprep.subr.mxu0 0.0
    %311 = vmatpush1.msra.mxu0 %v282
    %312 = vmatprep.subr.mxu0 0.0
    %313 = vmatpush1.msra.mxu0 0.0
    %314 = vmatprep.subr.mxu0 0.0
    %315 = vmatpush1.msra.mxu0 0.0
    %316 = vmatprep.subr.mxu0 0.0
    %317 = vmatpush1.msra.mxu0 0.0
    %318 = vmatprep.subr.mxu0 0.0
    %319 = vmatpush1.msra.mxu0 0.0
    %320 = vmatprep.subr.mxu0 0.0
    %321 = vmatpush1.msra.mxu0 0.0
    %322 = vmatprep.subr.mxu0 0.0
    %323 = vmatpush1.msra.mxu0 0.0
    %324 = vmatprep.subr.mxu0 0.0
    %325 = vmatpush1.msra.mxu0 0.0
    %326 = vmatprep.subr.mxu0 0.0
    %327 = vmatpush1.msra.mxu0 0.0
    %328 = vmatprep.subr.mxu0 0.0
    %329 = vmatpush1.msra.mxu0 0.0
    %330 = vmatprep.subr.mxu0 0.0
    %331 = vmatpush1.msra.mxu0 0.0
    %332 = vmatprep.subr.mxu0 0.0
    %333 = vmatpush1.msra.mxu0 0.0
    %334 = vmatprep.subr.mxu0 0.0
    %335 = vmatpush1.msra.mxu0 0.0
    %336 = vmatprep.subr.mxu0 0.0
    %337 = vmatpush1.msra.mxu0 0.0
    %338 = vmatprep.subr.mxu0 0.0
    %339 = vmatpush1.msra.mxu0 0.0
    %340 = vmatprep.subr.mxu0 0.0
    %341 = vmatpush1.msra.mxu0 0.0
    %342 = vmatprep.subr.mxu0 0.0
    %343 = vmatpush1.msra.mxu0 0.0
    %344 = vmatprep.subr.mxu0 0.0
    %345 = vmatpush1.msra.mxu0 0.0
    %346 = vmatprep.subr.mxu0 0.0
    %347 = vmatpush1.msra.mxu0 0.0
    %348 = vmatprep.subr.mxu0 0.0
    %349 = vmatpush1.msra.mxu0 0.0
    %350 = vmatprep.subr.mxu0 0.0
    %351 = vmatpush1.msra.mxu0 0.0
    %352 = vmatprep.subr.mxu0 0.0
    %353 = vmatpush1.msra.mxu0 0.0
    %354 = vmatprep.subr.mxu0 0.0
    %355 = vmatpush1.msra.mxu0 0.0
    %356 = vmatprep.subr.mxu0 0.0
    %357 = vmatpush1.msra.mxu0 0.0
    %358 = vmatprep.subr.mxu0 0.0
    %359 = vmatpush1.msra.mxu0 0.0
    %360 = vmatprep.subr.mxu0 0.0
    %361 = vmatpush1.msra.mxu0 0.0
    %362 = vmatprep.subr.mxu0 0.0
    %363 = vmatpush1.msra.mxu0 0.0
    %364 = vmatprep.subr.mxu0 0.0
    %365 = vmatpush1.msra.mxu0 0.0
    %366 = vmatprep.subr.mxu0 0.0
    %367 = vmatpush1.msra.mxu0 0.0
    %368 = vmatprep.mubr.f32.mxu0 0.0
    %369 = vmatmul.mubr.f32.gmra.mrb[0].mxu0 %v302
    %v370 = vpop.f32.mrb[0].mxu0
    %v371 = vadd.f32 %v298, %v370
    %v372 = vpop.f32.mrb[0].mxu0
    %373 = vdwg.mxu0
    %v375 = vlaneseq
    %v376 = vshrl.u32 %v375, 7
    %v377 = vsub.s32 0, %v376
    %v378 = vrot.slane %v288, %v377
    %380 = vmatprep.subr.mxu0 0.0
    %381 = vmatpush1.msra.mxu0 %v284
    %382 = vmatprep.subr.mxu0 0.0
    %383 = vmatpush1.msra.mxu0 %v285
    %384 = vmatprep.subr.mxu0 0.0
    %385 = vmatpush1.msra.mxu0 %v286
    %386 = vmatprep.subr.mxu0 0.0
    %387 = vmatpush1.msra.mxu0 %v287
    %388 = vmatprep.subr.mxu0 0.0
    %389 = vmatpush1.msra.mxu0 0.0
    %390 = vmatprep.subr.mxu0 0.0
    %391 = vmatpush1.msra.mxu0 0.0
    %392 = vmatprep.subr.mxu0 0.0
    %393 = vmatpush1.msra.mxu0 0.0
    %394 = vmatprep.subr.mxu0 0.0
    %395 = vmatpush1.msra.mxu0 0.0
    %396 = vmatprep.subr.mxu0 0.0
    %397 = vmatpush1.msra.mxu0 0.0
    %398 = vmatprep.subr.mxu0 0.0
    %399 = vmatpush1.msra.mxu0 0.0
    %400 = vmatprep.subr.mxu0 0.0
    %401 = vmatpush1.msra.mxu0 0.0
    %402 = vmatprep.subr.mxu0 0.0
    %403 = vmatpush1.msra.mxu0 0.0
    %404 = vmatprep.subr.mxu0 0.0
    %405 = vmatpush1.msra.mxu0 0.0
    %406 = vmatprep.subr.mxu0 0.0
    %407 = vmatpush1.msra.mxu0 0.0
    %408 = vmatprep.subr.mxu0 0.0
    %409 = vmatpush1.msra.mxu0 0.0
    %410 = vmatprep.subr.mxu0 0.0
    %411 = vmatpush1.msra.mxu0 0.0
    %412 = vmatprep.subr.mxu0 0.0
    %413 = vmatpush1.msra.mxu0 0.0
    %414 = vmatprep.subr.mxu0 0.0
    %415 = vmatpush1.msra.mxu0 0.0
    %416 = vmatprep.subr.mxu0 0.0
    %417 = vmatpush1.msra.mxu0 0.0
    %418 = vmatprep.subr.mxu0 0.0
    %419 = vmatpush1.msra.mxu0 0.0
    %420 = vmatprep.subr.mxu0 0.0
    %421 = vmatpush1.msra.mxu0 0.0
    %422 = vmatprep.subr.mxu0 0.0
    %423 = vmatpush1.msra.mxu0 0.0
    %424 = vmatprep.subr.mxu0 0.0
    %425 = vmatpush1.msra.mxu0 0.0
    %426 = vmatprep.subr.mxu0 0.0
    %427 = vmatpush1.msra.mxu0 0.0
    %428 = vmatprep.subr.mxu0 0.0
    %429 = vmatpush1.msra.mxu0 0.0
    %430 = vmatprep.subr.mxu0 0.0
    %431 = vmatpush1.msra.mxu0 0.0
    %432 = vmatprep.subr.mxu0 0.0
    %433 = vmatpush1.msra.mxu0 0.0
    %434 = vmatprep.subr.mxu0 0.0
    %435 = vmatpush1.msra.mxu0 0.0
    %436 = vmatprep.subr.mxu0 0.0
    %437 = vmatpush1.msra.mxu0 0.0
    %438 = vmatprep.subr.mxu0 0.0
    %439 = vmatpush1.msra.mxu0 0.0
    %440 = vmatprep.subr.mxu0 0.0
    %441 = vmatpush1.msra.mxu0 0.0
    %442 = vmatprep.subr.mxu0 0.0
    %443 = vmatpush1.msra.mxu0 0.0
    %444 = vmatprep.mubr.f32.mxu0 0.0
    %445 = vmatmul.mubr.f32.gmra.mrb[0].mxu0 %v302
    %v446 = vpop.f32.mrb[0].mxu0
    %v447 = vadd.f32 %v378, %v446
    %v448 = vpop.f32.mrb[0].mxu0
    %449 = vdwg.mxu0
    %451 = vrot.lane.b32.xlu0 %v447, 16
    %v452 = vpop.permute.xlu0 %451
    %455 = vrot.lane.b32.xlu0 %v371, 16
    %v456 = vpop.permute.xlu0 %455
    %458 = vrot.lane.b32.xlu0 %v447, 32
    %v459 = vpop.permute.xlu0 %458
    %461 = vrot.lane.b32.xlu0 %v371, 32
    %v462 = vpop.permute.xlu0 %461
    %464 = vrot.lane.b32.xlu0 %v447, 48
    %v465 = vpop.permute.xlu0 %464
    %vm467 = vcmask 130048
    %v468 = vsel %vm467, %v371, %v452
    %v469 = vsel %vm300, %v468, %v456
    %vm470 = vcmask 392192
    %v471 = vsel %vm470, %v469, %v459
    %vm472 = vcmask 523264
    %v473 = vsel %vm472, %v471, %v462
    %vm474 = vcmask 654336
    %v475 = vsel %vm474, %v473, %v465
    %v477 = vlaneseq
    %v478 = vshrl.u32 %v477, 7
    %v479 = vsub.s32 0, %v478
    %v480 = vrot.slane %v293, %v479
    %v483 = vsel %vm300, 0.0, 0
    %485 = vmatprep.subr.mxu0 0.0
    %486 = vmatpush1.msra.mxu0 %v289
    %487 = vmatprep.subr.mxu0 0.0
    %488 = vmatpush1.msra.mxu0 %v290
    %489 = vmatprep.subr.mxu0 0.0
    %490 = vmatpush1.msra.mxu0 %v291
    %491 = vmatprep.subr.mxu0 0.0
    %492 = vmatpush1.msra.mxu0 %v292
    %493 = vmatprep.subr.mxu0 0.0
    %494 = vmatpush1.msra.mxu0 0.0
    %495 = vmatprep.subr.mxu0 0.0
    %496 = vmatpush1.msra.mxu0 0.0
    %497 = vmatprep.subr.mxu0 0.0
    %498 = vmatpush1.msra.mxu0 0.0
    %499 = vmatprep.subr.mxu0 0.0
    %500 = vmatpush1.msra.mxu0 0.0
    %501 = vmatprep.subr.mxu0 0.0
    %502 = vmatpush1.msra.mxu0 0.0
    %503 = vmatprep.subr.mxu0 0.0
    %504 = vmatpush1.msra.mxu0 0.0
    %505 = vmatprep.subr.mxu0 0.0
    %506 = vmatpush1.msra.mxu0 0.0
    %507 = vmatprep.subr.mxu0 0.0
    %508 = vmatpush1.msra.mxu0 0.0
    %509 = vmatprep.subr.mxu0 0.0
    %510 = vmatpush1.msra.mxu0 0.0
    %511 = vmatprep.subr.mxu0 0.0
    %512 = vmatpush1.msra.mxu0 0.0
    %513 = vmatprep.subr.mxu0 0.0
    %514 = vmatpush1.msra.mxu0 0.0
    %515 = vmatprep.subr.mxu0 0.0
    %516 = vmatpush1.msra.mxu0 0.0
    %517 = vmatprep.subr.mxu0 0.0
    %518 = vmatpush1.msra.mxu0 0.0
    %519 = vmatprep.subr.mxu0 0.0
    %520 = vmatpush1.msra.mxu0 0.0
    %521 = vmatprep.subr.mxu0 0.0
    %522 = vmatpush1.msra.mxu0 0.0
    %523 = vmatprep.subr.mxu0 0.0
    %524 = vmatpush1.msra.mxu0 0.0
    %525 = vmatprep.subr.mxu0 0.0
    %526 = vmatpush1.msra.mxu0 0.0
    %527 = vmatprep.subr.mxu0 0.0
    %528 = vmatpush1.msra.mxu0 0.0
    %529 = vmatprep.subr.mxu0 0.0
    %530 = vmatpush1.msra.mxu0 0.0
    %531 = vmatprep.subr.mxu0 0.0
    %532 = vmatpush1.msra.mxu0 0.0
    %533 = vmatprep.subr.mxu0 0.0
    %534 = vmatpush1.msra.mxu0 0.0
    %535 = vmatprep.subr.mxu0 0.0
    %536 = vmatpush1.msra.mxu0 0.0
    %537 = vmatprep.subr.mxu0 0.0
    %538 = vmatpush1.msra.mxu0 0.0
    %539 = vmatprep.subr.mxu0 0.0
    %540 = vmatpush1.msra.mxu0 0.0
    %541 = vmatprep.subr.mxu0 0.0
    %542 = vmatpush1.msra.mxu0 0.0
    %543 = vmatprep.subr.mxu0 0.0
    %544 = vmatpush1.msra.mxu0 0.0
    %545 = vmatprep.subr.mxu0 0.0
    %546 = vmatpush1.msra.mxu0 0.0
    %547 = vmatprep.subr.mxu0 0.0
    %548 = vmatpush1.msra.mxu0 0.0
    %549 = vmatprep.mubr.f32.mxu0 0.0
    %550 = vmatmul.mubr.f32.gmra.mrb[0].mxu0 %v483
    %v551 = vpop.f32.mrb[0].mxu0
    %v552 = vadd.f32 %v480, %v551
    %v553 = vpop.f32.mrb[0].mxu0
    %554 = vdwg.mxu0
    %v555 = vadd.f32 %v475, %v552
    %v556 = vxor.u32 %v555, 2147483648
    %v557 = vmul.f32 %v556, 1.442695
    %v558 = vpow.pop %v557
    %v559 = vadd.f32 %v558, 1.0
    %v560 = vrcp.pop %v559
    %v561 = vmul.f32 1.0, %v560
    %563 = vrot.lane.b32.xlu0 %v552, 64
    %v564 = vpop.permute.xlu0 %563
    %v566 = vmul.f32 %v561, %v564
    %568 = vrot.lane.b32.xlu0 %v566, 64
    %v569 = vpop.permute.xlu0 %568
    %v571 = vadd.f32 %v475, %v569
    %v572 = vtanh.pop %v571
    %v573 = vsub.f32 1.0, %v561
    %575 = vrot.lane.b32.xlu0 %v572, 96
    %v576 = vpop.permute.xlu0 %575
    %v578 = vmul.f32 %v573, %v576
    %v579 = vadd.f32 %v578, 0.0
    %581 = vrot.lane.b32.xlu0 %v579, 96
    %v582 = vpop.permute.xlu0 %581
    %v583 = vsel %vm300, %v582, 0
    %585 = vmatprep.subr.mxu0 0.0
    %586 = vmatpush1.msra.mxu0 %v289
    %587 = vmatprep.subr.mxu0 0.0
    %588 = vmatpush1.msra.mxu0 %v290
    %589 = vmatprep.subr.mxu0 0.0
    %590 = vmatpush1.msra.mxu0 %v291
    %591 = vmatprep.subr.mxu0 0.0
    %592 = vmatpush1.msra.mxu0 %v292
    %593 = vmatprep.subr.mxu0 0.0
    %594 = vmatpush1.msra.mxu0 0.0
    %595 = vmatprep.subr.mxu0 0.0
    %596 = vmatpush1.msra.mxu0 0.0
    %597 = vmatprep.subr.mxu0 0.0
    %598 = vmatpush1.msra.mxu0 0.0
    %599 = vmatprep.subr.mxu0 0.0
    %600 = vmatpush1.msra.mxu0 0.0
    %601 = vmatprep.subr.mxu0 0.0
    %602 = vmatpush1.msra.mxu0 0.0
    %603 = vmatprep.subr.mxu0 0.0
    %604 = vmatpush1.msra.mxu0 0.0
    %605 = vmatprep.subr.mxu0 0.0
    %606 = vmatpush1.msra.mxu0 0.0
    %607 = vmatprep.subr.mxu0 0.0
    %608 = vmatpush1.msra.mxu0 0.0
    %609 = vmatprep.subr.mxu0 0.0
    %610 = vmatpush1.msra.mxu0 0.0
    %611 = vmatprep.subr.mxu0 0.0
    %612 = vmatpush1.msra.mxu0 0.0
    %613 = vmatprep.subr.mxu0 0.0
    %614 = vmatpush1.msra.mxu0 0.0
    %615 = vmatprep.subr.mxu0 0.0
    %616 = vmatpush1.msra.mxu0 0.0
    %617 = vmatprep.subr.mxu0 0.0
    %618 = vmatpush1.msra.mxu0 0.0
    %619 = vmatprep.subr.mxu0 0.0
    %620 = vmatpush1.msra.mxu0 0.0
    %621 = vmatprep.subr.mxu0 0.0
    %622 = vmatpush1.msra.mxu0 0.0
    %623 = vmatprep.subr.mxu0 0.0
    %624 = vmatpush1.msra.mxu0 0.0
    %625 = vmatprep.subr.mxu0 0.0
    %626 = vmatpush1.msra.mxu0 0.0
    %627 = vmatprep.subr.mxu0 0.0
    %628 = vmatpush1.msra.mxu0 0.0
    %629 = vmatprep.subr.mxu0 0.0
    %630 = vmatpush1.msra.mxu0 0.0
    %631 = vmatprep.subr.mxu0 0.0
    %632 = vmatpush1.msra.mxu0 0.0
    %633 = vmatprep.subr.mxu0 0.0
    %634 = vmatpush1.msra.mxu0 0.0
    %635 = vmatprep.subr.mxu0 0.0
    %636 = vmatpush1.msra.mxu0 0.0
    %637 = vmatprep.subr.mxu0 0.0
    %638 = vmatpush1.msra.mxu0 0.0
    %639 = vmatprep.subr.mxu0 0.0
    %640 = vmatpush1.msra.mxu0 0.0
    %641 = vmatprep.subr.mxu0 0.0
    %642 = vmatpush1.msra.mxu0 0.0
    %643 = vmatprep.subr.mxu0 0.0
    %644 = vmatpush1.msra.mxu0 0.0
    %645 = vmatprep.subr.mxu0 0.0
    %646 = vmatpush1.msra.mxu0 0.0
    %647 = vmatprep.subr.mxu0 0.0
    %648 = vmatpush1.msra.mxu0 0.0
    %649 = vmatprep.mubr.f32.mxu0 0.0
    %650 = vmatmul.mubr.f32.gmra.mrb[0].mxu0 %v583
    %v651 = vpop.f32.mrb[0].mxu0
    %v652 = vadd.f32 %v480, %v651
    %v653 = vpop.f32.mrb[0].mxu0
    %654 = vdwg.mxu0
    %v655 = vadd.f32 %v475, %v652
    %v656 = vxor.u32 %v655, 2147483648
    %v657 = vmul.f32 %v656, 1.442695
    %v658 = vpow.pop %v657
    %v659 = vadd.f32 %v658, 1.0
    %v660 = vrcp.pop %v659
    %v661 = vmul.f32 1.0, %v660
    %663 = vrot.lane.b32.xlu0 %v652, 64
    %v664 = vpop.permute.xlu0 %663
    %v666 = vmul.f32 %v661, %v664
    %668 = vrot.lane.b32.xlu0 %v666, 64
    %v669 = vpop.permute.xlu0 %668
    %v671 = vadd.f32 %v475, %v669
    %v672 = vtanh.pop %v671
    %v673 = vsub.f32 1.0, %v661
    %674 = vrot.lane.b32.xlu0 %v579, 32
    %v675 = vpop.permute.xlu0 %674
    %v677 = vsub.f32 %v672, %v675
    %679 = vrot.lane.b32.xlu0 %v677, 96
    %v680 = vpop.permute.xlu0 %679
    %v682 = vmul.f32 %v673, %v680
    %v683 = vadd.f32 %v579, %v682
    %v684 = vld [vmem:[%s9] sm:$0xff]
    %v685 = vld [vmem:[%s9 + $0x8] sm:$0xff]
    %v686 = vld [vmem:[%s9 + $0x10] sm:$0xff]
    %v687 = vld [vmem:[%s9 + $0x18] sm:$0xff]
    %v688 = vld [vmem:[%s10] sm:$0x1]
    %v689 = vld [vmem:[%s11] sm:$0xff]
    %v690 = vld [vmem:[%s11 + $0x8] sm:$0xff]
    %v691 = vld [vmem:[%s11 + $0x10] sm:$0xff]
    %v692 = vld [vmem:[%s11 + $0x18] sm:$0xff]
    %v693 = vld [vmem:[%s12] sm:$0x1]
    %v694 = vld [vmem:[%s13] sm:$0xff]
    %v695 = vld [vmem:[%s13 + $0x8] sm:$0xff]
    %v696 = vld [vmem:[%s13 + $0x10] sm:$0xff]
    %v697 = vld [vmem:[%s13 + $0x18] sm:$0xff]
    %v698 = vld [vmem:[%s14] sm:$0x1]
    %701 = vrot.lane.b32.xlu0 %v683, 96
    %v702 = vpop.permute.xlu0 %701
    %v704 = vsel %vm467, %v582, %v702
    %v705 = vsel %vm467, %v702, %v582
    %v707 = vlaneseq
    %v708 = vshrl.u32 %v707, 7
    %v709 = vsub.s32 0, %v708
    %v710 = vrot.slane %v688, %v709
    %v713 = vsel %vm300, %v704, 0
    %v716 = vsel %vm300, %v705, 0
    %718 = vmatprep.subr.mxu0 0.0
    %719 = vmatpush1.msra.mxu0 %v684
    %720 = vmatprep.subr.mxu0 0.0
    %721 = vmatpush1.msra.mxu0 %v685
    %722 = vmatprep.subr.mxu0 0.0
    %723 = vmatpush1.msra.mxu0 %v686
    %724 = vmatprep.subr.mxu0 0.0
    %725 = vmatpush1.msra.mxu0 %v687
    %726 = vmatprep.subr.mxu0 0.0
    %727 = vmatpush1.msra.mxu0 0.0
    %728 = vmatprep.subr.mxu0 0.0
    %729 = vmatpush1.msra.mxu0 0.0
    %730 = vmatprep.subr.mxu0 0.0
    %731 = vmatpush1.msra.mxu0 0.0
    %732 = vmatprep.subr.mxu0 0.0
    %733 = vmatpush1.msra.mxu0 0.0
    %734 = vmatprep.subr.mxu0 0.0
    %735 = vmatpush1.msra.mxu0 0.0
    %736 = vmatprep.subr.mxu0 0.0
    %737 = vmatpush1.msra.mxu0 0.0
    %738 = vmatprep.subr.mxu0 0.0
    %739 = vmatpush1.msra.mxu0 0.0
    %740 = vmatprep.subr.mxu0 0.0
    %741 = vmatpush1.msra.mxu0 0.0
    %742 = vmatprep.subr.mxu0 0.0
    %743 = vmatpush1.msra.mxu0 0.0
    %744 = vmatprep.subr.mxu0 0.0
    %745 = vmatpush1.msra.mxu0 0.0
    %746 = vmatprep.subr.mxu0 0.0
    %747 = vmatpush1.msra.mxu0 0.0
    %748 = vmatprep.subr.mxu0 0.0
    %749 = vmatpush1.msra.mxu0 0.0
    %750 = vmatprep.subr.mxu0 0.0
    %751 = vmatpush1.msra.mxu0 0.0
    %752 = vmatprep.subr.mxu0 0.0
    %753 = vmatpush1.msra.mxu0 0.0
    %754 = vmatprep.subr.mxu0 0.0
    %755 = vmatpush1.msra.mxu0 0.0
    %756 = vmatprep.subr.mxu0 0.0
    %757 = vmatpush1.msra.mxu0 0.0
    %758 = vmatprep.subr.mxu0 0.0
    %759 = vmatpush1.msra.mxu0 0.0
    %760 = vmatprep.subr.mxu0 0.0
    %761 = vmatpush1.msra.mxu0 0.0
    %762 = vmatprep.subr.mxu0 0.0
    %763 = vmatpush1.msra.mxu0 0.0
    %764 = vmatprep.subr.mxu0 0.0
    %765 = vmatpush1.msra.mxu0 0.0
    %766 = vmatprep.subr.mxu0 0.0
    %767 = vmatpush1.msra.mxu0 0.0
    %768 = vmatprep.subr.mxu0 0.0
    %769 = vmatpush1.msra.mxu0 0.0
    %770 = vmatprep.subr.mxu0 0.0
    %771 = vmatpush1.msra.mxu0 0.0
    %772 = vmatprep.subr.mxu0 0.0
    %773 = vmatpush1.msra.mxu0 0.0
    %774 = vmatprep.subr.mxu0 0.0
    %775 = vmatpush1.msra.mxu0 0.0
    %776 = vmatprep.subr.mxu0 0.0
    %777 = vmatpush1.msra.mxu0 0.0
    %778 = vmatprep.subr.mxu0 0.0
    %779 = vmatpush1.msra.mxu0 0.0
    %780 = vmatprep.subr.mxu0 0.0
    %781 = vmatpush1.msra.mxu0 0.0
    %782 = vmatprep.mubr.f32.mxu0 0.0
    %783 = vmatmul.mubr.f32.gmra.mrb[0].mxu0 %v713
    %v784 = vpop.f32.mrb[0].mxu0
    %v785 = vadd.f32 %v710, %v784
    %v786 = vpop.f32.mrb[0].mxu0
    %787 = vmatprep.mubr.f32.mxu0 0.0
    %788 = vmatmul.mubr.f32.gmra.mrb[0].mxu0 %v716
    %v789 = vpop.f32.mrb[0].mxu0
    %v790 = vadd.f32 %v710, %v789
    %v791 = vpop.f32.mrb[0].mxu0
    %792 = vdwg.mxu0
    %v794 = vlaneseq
    %v795 = vshrl.u32 %v794, 7
    %v796 = vsub.s32 0, %v795
    %v797 = vrot.slane %v693, %v796
    %799 = vmatprep.subr.mxu0 0.0
    %800 = vmatpush1.msra.mxu0 %v689
    %801 = vmatprep.subr.mxu0 0.0
    %802 = vmatpush1.msra.mxu0 %v690
    %803 = vmatprep.subr.mxu0 0.0
    %804 = vmatpush1.msra.mxu0 %v691
    %805 = vmatprep.subr.mxu0 0.0
    %806 = vmatpush1.msra.mxu0 %v692
    %807 = vmatprep.subr.mxu0 0.0
    %808 = vmatpush1.msra.mxu0 0.0
    %809 = vmatprep.subr.mxu0 0.0
    %810 = vmatpush1.msra.mxu0 0.0
    %811 = vmatprep.subr.mxu0 0.0
    %812 = vmatpush1.msra.mxu0 0.0
    %813 = vmatprep.subr.mxu0 0.0
    %814 = vmatpush1.msra.mxu0 0.0
    %815 = vmatprep.subr.mxu0 0.0
    %816 = vmatpush1.msra.mxu0 0.0
    %817 = vmatprep.subr.mxu0 0.0
    %818 = vmatpush1.msra.mxu0 0.0
    %819 = vmatprep.subr.mxu0 0.0
    %820 = vmatpush1.msra.mxu0 0.0
    %821 = vmatprep.subr.mxu0 0.0
    %822 = vmatpush1.msra.mxu0 0.0
    %823 = vmatprep.subr.mxu0 0.0
    %824 = vmatpush1.msra.mxu0 0.0
    %825 = vmatprep.subr.mxu0 0.0
    %826 = vmatpush1.msra.mxu0 0.0
    %827 = vmatprep.subr.mxu0 0.0
    %828 = vmatpush1.msra.mxu0 0.0
    %829 = vmatprep.subr.mxu0 0.0
    %830 = vmatpush1.msra.mxu0 0.0
    %831 = vmatprep.subr.mxu0 0.0
    %832 = vmatpush1.msra.mxu0 0.0
    %833 = vmatprep.subr.mxu0 0.0
    %834 = vmatpush1.msra.mxu0 0.0
    %835 = vmatprep.subr.mxu0 0.0
    %836 = vmatpush1.msra.mxu0 0.0
    %837 = vmatprep.subr.mxu0 0.0
    %838 = vmatpush1.msra.mxu0 0.0
    %839 = vmatprep.subr.mxu0 0.0
    %840 = vmatpush1.msra.mxu0 0.0
    %841 = vmatprep.subr.mxu0 0.0
    %842 = vmatpush1.msra.mxu0 0.0
    %843 = vmatprep.subr.mxu0 0.0
    %844 = vmatpush1.msra.mxu0 0.0
    %845 = vmatprep.subr.mxu0 0.0
    %846 = vmatpush1.msra.mxu0 0.0
    %847 = vmatprep.subr.mxu0 0.0
    %848 = vmatpush1.msra.mxu0 0.0
    %849 = vmatprep.subr.mxu0 0.0
    %850 = vmatpush1.msra.mxu0 0.0
    %851 = vmatprep.subr.mxu0 0.0
    %852 = vmatpush1.msra.mxu0 0.0
    %853 = vmatprep.subr.mxu0 0.0
    %854 = vmatpush1.msra.mxu0 0.0
    %855 = vmatprep.subr.mxu0 0.0
    %856 = vmatpush1.msra.mxu0 0.0
    %857 = vmatprep.subr.mxu0 0.0
    %858 = vmatpush1.msra.mxu0 0.0
    %859 = vmatprep.subr.mxu0 0.0
    %860 = vmatpush1.msra.mxu0 0.0
    %861 = vmatprep.subr.mxu0 0.0
    %862 = vmatpush1.msra.mxu0 0.0
    %863 = vmatprep.mubr.f32.mxu0 0.0
    %864 = vmatmul.mubr.f32.gmra.mrb[0].mxu0 %v713
    %v865 = vpop.f32.mrb[0].mxu0
    %v866 = vadd.f32 %v797, %v865
    %v867 = vpop.f32.mrb[0].mxu0
    %868 = vmatprep.mubr.f32.mxu0 0.0
    %869 = vmatmul.mubr.f32.gmra.mrb[0].mxu0 %v716
    %v870 = vpop.f32.mrb[0].mxu0
    %v871 = vadd.f32 %v797, %v870
    %v872 = vpop.f32.mrb[0].mxu0
    %873 = vdwg.mxu0
    %875 = vrot.lane.b32.xlu0 %v871, 16
    %v876 = vpop.permute.xlu0 %875
    %879 = vrot.lane.b32.xlu0 %v785, 16
    %v880 = vpop.permute.xlu0 %879
    %882 = vrot.lane.b32.xlu0 %v871, 32
    %v883 = vpop.permute.xlu0 %882
    %885 = vrot.lane.b32.xlu0 %v785, 32
    %v886 = vpop.permute.xlu0 %885
    %888 = vrot.lane.b32.xlu0 %v871, 48
    %v889 = vpop.permute.xlu0 %888
    %v891 = vsel %vm467, %v785, %v876
    %v892 = vsel %vm300, %v891, %v880
    %v893 = vsel %vm470, %v892, %v883
    %v894 = vsel %vm472, %v893, %v886
    %v895 = vsel %vm474, %v894, %v889
    %897 = vrot.lane.b32.xlu0 %v866, 16
    %v898 = vpop.permute.xlu0 %897
    %901 = vrot.lane.b32.xlu0 %v790, 16
    %v902 = vpop.permute.xlu0 %901
    %904 = vrot.lane.b32.xlu0 %v866, 32
    %v905 = vpop.permute.xlu0 %904
    %907 = vrot.lane.b32.xlu0 %v790, 32
    %v908 = vpop.permute.xlu0 %907
    %910 = vrot.lane.b32.xlu0 %v866, 48
    %v911 = vpop.permute.xlu0 %910
    %v913 = vsel %vm467, %v790, %v898
    %v914 = vsel %vm300, %v913, %v902
    %v915 = vsel %vm470, %v914, %v905
    %v916 = vsel %vm472, %v915, %v908
    %v917 = vsel %vm474, %v916, %v911
    %v919 = vlaneseq
    %v920 = vshrl.u32 %v919, 7
    %v921 = vsub.s32 0, %v920
    %v922 = vrot.slane %v698, %v921
    %924 = vmatprep.subr.mxu0 0.0
    %925 = vmatpush1.msra.mxu0 %v694
    %926 = vmatprep.subr.mxu0 0.0
    %927 = vmatpush1.msra.mxu0 %v695
    %928 = vmatprep.subr.mxu0 0.0
    %929 = vmatpush1.msra.mxu0 %v696
    %930 = vmatprep.subr.mxu0 0.0
    %931 = vmatpush1.msra.mxu0 %v697
    %932 = vmatprep.subr.mxu0 0.0
    %933 = vmatpush1.msra.mxu0 0.0
    %934 = vmatprep.subr.mxu0 0.0
    %935 = vmatpush1.msra.mxu0 0.0
    %936 = vmatprep.subr.mxu0 0.0
    %937 = vmatpush1.msra.mxu0 0.0
    %938 = vmatprep.subr.mxu0 0.0
    %939 = vmatpush1.msra.mxu0 0.0
    %940 = vmatprep.subr.mxu0 0.0
    %941 = vmatpush1.msra.mxu0 0.0
    %942 = vmatprep.subr.mxu0 0.0
    %943 = vmatpush1.msra.mxu0 0.0
    %944 = vmatprep.subr.mxu0 0.0
    %945 = vmatpush1.msra.mxu0 0.0
    %946 = vmatprep.subr.mxu0 0.0
    %947 = vmatpush1.msra.mxu0 0.0
    %948 = vmatprep.subr.mxu0 0.0
    %949 = vmatpush1.msra.mxu0 0.0
    %950 = vmatprep.subr.mxu0 0.0
    %951 = vmatpush1.msra.mxu0 0.0
    %952 = vmatprep.subr.mxu0 0.0
    %953 = vmatpush1.msra.mxu0 0.0
    %954 = vmatprep.subr.mxu0 0.0
    %955 = vmatpush1.msra.mxu0 0.0
    %956 = vmatprep.subr.mxu0 0.0
    %957 = vmatpush1.msra.mxu0 0.0
    %958 = vmatprep.subr.mxu0 0.0
    %959 = vmatpush1.msra.mxu0 0.0
    %960 = vmatprep.subr.mxu0 0.0
    %961 = vmatpush1.msra.mxu0 0.0
    %962 = vmatprep.subr.mxu0 0.0
    %963 = vmatpush1.msra.mxu0 0.0
    %964 = vmatprep.subr.mxu0 0.0
    %965 = vmatpush1.msra.mxu0 0.0
    %966 = vmatprep.subr.mxu0 0.0
    %967 = vmatpush1.msra.mxu0 0.0
    %968 = vmatprep.subr.mxu0 0.0
    %969 = vmatpush1.msra.mxu0 0.0
    %970 = vmatprep.subr.mxu0 0.0
    %971 = vmatpush1.msra.mxu0 0.0
    %972 = vmatprep.subr.mxu0 0.0
    %973 = vmatpush1.msra.mxu0 0.0
    %974 = vmatprep.subr.mxu0 0.0
    %975 = vmatpush1.msra.mxu0 0.0
    %976 = vmatprep.subr.mxu0 0.0
    %977 = vmatpush1.msra.mxu0 0.0
    %978 = vmatprep.subr.mxu0 0.0
    %979 = vmatpush1.msra.mxu0 0.0
    %980 = vmatprep.subr.mxu0 0.0
    %981 = vmatpush1.msra.mxu0 0.0
    %982 = vmatprep.subr.mxu0 0.0
    %983 = vmatpush1.msra.mxu0 0.0
    %984 = vmatprep.subr.mxu0 0.0
    %985 = vmatpush1.msra.mxu0 0.0
    %986 = vmatprep.subr.mxu0 0.0
    %987 = vmatpush1.msra.mxu0 0.0
    %988 = vmatprep.mubr.f32.mxu0 0.0
    %989 = vmatmul.mubr.f32.gmra.mrb[0].mxu0 %v483
    %v990 = vpop.f32.mrb[0].mxu0
    %v991 = vadd.f32 %v922, %v990
    %v992 = vpop.f32.mrb[0].mxu0
    %993 = vdwg.mxu0
    %v994 = vadd.f32 %v895, %v991
    %v995 = vxor.u32 %v994, 2147483648
    %v996 = vmul.f32 %v995, 1.442695
    %v997 = vpow.pop %v996
    %v998 = vadd.f32 %v997, 1.0
    %v999 = vrcp.pop %v998
    %v1000 = vmul.f32 1.0, %v999
    %1002 = vrot.lane.b32.xlu0 %v991, 64
    %v1003 = vpop.permute.xlu0 %1002
    %v1005 = vmul.f32 %v1000, %v1003
    %1007 = vrot.lane.b32.xlu0 %v1005, 64
    %v1008 = vpop.permute.xlu0 %1007
    %v1010 = vadd.f32 %v895, %v1008
    %v1011 = vtanh.pop %v1010
    %v1012 = vsub.f32 1.0, %v1000
    %1014 = vrot.lane.b32.xlu0 %v1011, 96
    %v1015 = vpop.permute.xlu0 %1014
    %v1017 = vmul.f32 %v1012, %v1015
    %v1018 = vadd.f32 %v1017, 0.0
    %1020 = vrot.lane.b32.xlu0 %v1018, 96
    %v1021 = vpop.permute.xlu0 %1020
    %v1022 = vsel %vm300, %v1021, 0
    %1024 = vmatprep.subr.mxu0 0.0
    %1025 = vmatpush1.msra.mxu0 %v694
    %1026 = vmatprep.subr.mxu0 0.0
    %1027 = vmatpush1.msra.mxu0 %v695
    %1028 = vmatprep.subr.mxu0 0.0
    %1029 = vmatpush1.msra.mxu0 %v696
    %1030 = vmatprep.subr.mxu0 0.0
    %1031 = vmatpush1.msra.mxu0 %v697
    %1032 = vmatprep.subr.mxu0 0.0
    %1033 = vmatpush1.msra.mxu0 0.0
    %1034 = vmatprep.subr.mxu0 0.0
    %1035 = vmatpush1.msra.mxu0 0.0
    %1036 = vmatprep.subr.mxu0 0.0
    %1037 = vmatpush1.msra.mxu0 0.0
    %1038 = vmatprep.subr.mxu0 0.0
    %1039 = vmatpush1.msra.mxu0 0.0
    %1040 = vmatprep.subr.mxu0 0.0
    %1041 = vmatpush1.msra.mxu0 0.0
    %1042 = vmatprep.subr.mxu0 0.0
    %1043 = vmatpush1.msra.mxu0 0.0
    %1044 = vmatprep.subr.mxu0 0.0
    %1045 = vmatpush1.msra.mxu0 0.0
    %1046 = vmatprep.subr.mxu0 0.0
    %1047 = vmatpush1.msra.mxu0 0.0
    %1048 = vmatprep.subr.mxu0 0.0
    %1049 = vmatpush1.msra.mxu0 0.0
    %1050 = vmatprep.subr.mxu0 0.0
    %1051 = vmatpush1.msra.mxu0 0.0
    %1052 = vmatprep.subr.mxu0 0.0
    %1053 = vmatpush1.msra.mxu0 0.0
    %1054 = vmatprep.subr.mxu0 0.0
    %1055 = vmatpush1.msra.mxu0 0.0
    %1056 = vmatprep.subr.mxu0 0.0
    %1057 = vmatpush1.msra.mxu0 0.0
    %1058 = vmatprep.subr.mxu0 0.0
    %1059 = vmatpush1.msra.mxu0 0.0
    %1060 = vmatprep.subr.mxu0 0.0
    %1061 = vmatpush1.msra.mxu0 0.0
    %1062 = vmatprep.subr.mxu0 0.0
    %1063 = vmatpush1.msra.mxu0 0.0
    %1064 = vmatprep.subr.mxu0 0.0
    %1065 = vmatpush1.msra.mxu0 0.0
    %1066 = vmatprep.subr.mxu0 0.0
    %1067 = vmatpush1.msra.mxu0 0.0
    %1068 = vmatprep.subr.mxu0 0.0
    %1069 = vmatpush1.msra.mxu0 0.0
    %1070 = vmatprep.subr.mxu0 0.0
    %1071 = vmatpush1.msra.mxu0 0.0
    %1072 = vmatprep.subr.mxu0 0.0
    %1073 = vmatpush1.msra.mxu0 0.0
    %1074 = vmatprep.subr.mxu0 0.0
    %1075 = vmatpush1.msra.mxu0 0.0
    %1076 = vmatprep.subr.mxu0 0.0
    %1077 = vmatpush1.msra.mxu0 0.0
    %1078 = vmatprep.subr.mxu0 0.0
    %1079 = vmatpush1.msra.mxu0 0.0
    %1080 = vmatprep.subr.mxu0 0.0
    %1081 = vmatpush1.msra.mxu0 0.0
    %1082 = vmatprep.subr.mxu0 0.0
    %1083 = vmatpush1.msra.mxu0 0.0
    %1084 = vmatprep.subr.mxu0 0.0
    %1085 = vmatpush1.msra.mxu0 0.0
    %1086 = vmatprep.subr.mxu0 0.0
    %1087 = vmatpush1.msra.mxu0 0.0
    %1088 = vmatprep.mubr.f32.mxu0 0.0
    %1089 = vmatmul.mubr.f32.gmra.mrb[0].mxu0 %v1022
    %v1090 = vpop.f32.mrb[0].mxu0
    %v1091 = vadd.f32 %v922, %v1090
    %v1092 = vpop.f32.mrb[0].mxu0
    %1093 = vdwg.mxu0
    %v1094 = vadd.f32 %v917, %v1091
    %v1095 = vxor.u32 %v1094, 2147483648
    %v1096 = vmul.f32 %v1095, 1.442695
    %v1097 = vpow.pop %v1096
    %v1098 = vadd.f32 %v1097, 1.0
    %v1099 = vrcp.pop %v1098
    %v1100 = vmul.f32 1.0, %v1099
    %1102 = vrot.lane.b32.xlu0 %v1091, 64
    %v1103 = vpop.permute.xlu0 %1102
    %v1105 = vmul.f32 %v1100, %v1103
    %1107 = vrot.lane.b32.xlu0 %v1105, 64
    %v1108 = vpop.permute.xlu0 %1107
    %v1110 = vadd.f32 %v917, %v1108
    %v1111 = vtanh.pop %v1110
    %v1112 = vsub.f32 1.0, %v1100
    %1113 = vrot.lane.b32.xlu0 %v1018, 32
    %v1114 = vpop.permute.xlu0 %1113
    %v1116 = vsub.f32 %v1111, %v1114
    %1118 = vrot.lane.b32.xlu0 %v1116, 96
    %v1119 = vpop.permute.xlu0 %1118
    %v1121 = vmul.f32 %v1112, %v1119
    %v1122 = vadd.f32 %v1018, %v1121
    %v1123 = vld [vmem:[%s15] sm:$0xff]
    %v1124 = vld [vmem:[%s15 + $0x8] sm:$0xff]
    %v1125 = vld [vmem:[%s16] sm:$0x1]
    %v1127 = vlaneseq
    %v1128 = vshrl.u32 %v1127, 7
    %v1129 = vsub.s32 0, %v1128
    %v1130 = vrot.slane %v1125, %v1129
    %1133 = vrot.lane.b32.xlu0 %v1122, 96
    %v1134 = vpop.permute.xlu0 %1133
    %v1135 = vsel %vm467, %v1021, 0
    %v1137 = vsel %vm467, %v1134, 0
    %1139 = vmatprep.subr.mxu0 0.0
    %1140 = vmatpush1.msra.mxu0 %v1123
    %1141 = vmatprep.subr.mxu0 0.0
    %1142 = vmatpush1.msra.mxu0 %v1124
    %1143 = vmatprep.subr.mxu0 0.0
    %1144 = vmatpush1.msra.mxu0 0.0
    %1145 = vmatprep.subr.mxu0 0.0
    %1146 = vmatpush1.msra.mxu0 0.0
    %1147 = vmatprep.subr.mxu0 0.0
    %1148 = vmatpush1.msra.mxu0 0.0
    %1149 = vmatprep.subr.mxu0 0.0
    %1150 = vmatpush1.msra.mxu0 0.0
    %1151 = vmatprep.subr.mxu0 0.0
    %1152 = vmatpush1.msra.mxu0 0.0
    %1153 = vmatprep.subr.mxu0 0.0
    %1154 = vmatpush1.msra.mxu0 0.0
    %1155 = vmatprep.subr.mxu0 0.0
    %1156 = vmatpush1.msra.mxu0 0.0
    %1157 = vmatprep.subr.mxu0 0.0
    %1158 = vmatpush1.msra.mxu0 0.0
    %1159 = vmatprep.subr.mxu0 0.0
    %1160 = vmatpush1.msra.mxu0 0.0
    %1161 = vmatprep.subr.mxu0 0.0
    %1162 = vmatpush1.msra.mxu0 0.0
    %1163 = vmatprep.subr.mxu0 0.0
    %1164 = vmatpush1.msra.mxu0 0.0
    %1165 = vmatprep.subr.mxu0 0.0
    %1166 = vmatpush1.msra.mxu0 0.0
    %1167 = vmatprep.subr.mxu0 0.0
    %1168 = vmatpush1.msra.mxu0 0.0
    %1169 = vmatprep.subr.mxu0 0.0
    %1170 = vmatpush1.msra.mxu0 0.0
    %1171 = vmatprep.subr.mxu0 0.0
    %1172 = vmatpush1.msra.mxu0 0.0
    %1173 = vmatprep.subr.mxu0 0.0
    %1174 = vmatpush1.msra.mxu0 0.0
    %1175 = vmatprep.subr.mxu0 0.0
    %1176 = vmatpush1.msra.mxu0 0.0
    %1177 = vmatprep.subr.mxu0 0.0
    %1178 = vmatpush1.msra.mxu0 0.0
    %1179 = vmatprep.subr.mxu0 0.0
    %1180 = vmatpush1.msra.mxu0 0.0
    %1181 = vmatprep.subr.mxu0 0.0
    %1182 = vmatpush1.msra.mxu0 0.0
    %1183 = vmatprep.subr.mxu0 0.0
    %1184 = vmatpush1.msra.mxu0 0.0
    %1185 = vmatprep.subr.mxu0 0.0
    %1186 = vmatpush1.msra.mxu0 0.0
    %1187 = vmatprep.subr.mxu0 0.0
    %1188 = vmatpush1.msra.mxu0 0.0
    %1189 = vmatprep.subr.mxu0 0.0
    %1190 = vmatpush1.msra.mxu0 0.0
    %1191 = vmatprep.subr.mxu0 0.0
    %1192 = vmatpush1.msra.mxu0 0.0
    %1193 = vmatprep.subr.mxu0 0.0
    %1194 = vmatpush1.msra.mxu0 0.0
    %1195 = vmatprep.subr.mxu0 0.0
    %1196 = vmatpush1.msra.mxu0 0.0
    %1197 = vmatprep.subr.mxu0 0.0
    %1198 = vmatpush1.msra.mxu0 0.0
    %1199 = vmatprep.subr.mxu0 0.0
    %1200 = vmatpush1.msra.mxu0 0.0
    %1201 = vmatprep.subr.mxu0 0.0
    %1202 = vmatpush1.msra.mxu0 0.0
    %1203 = vmatprep.mubr.f32.mxu0 0.0
    %1204 = vmatmul.mubr.f32.gmra.mrb[0].mxu0 %v1135
    %v1205 = vpop.f32.mrb[0].mxu0
    %v1206 = vadd.f32 %v1130, %v1205
    %v1207 = vpop.f32.mrb[0].mxu0
    %1208 = vmatprep.mubr.f32.mxu0 0.0
    %1209 = vmatmul.mubr.f32.gmra.mrb[0].mxu0 %v1137
    %v1210 = vpop.f32.mrb[0].mxu0
    %v1211 = vadd.f32 %v1130, %v1210
    %v1212 = vpop.f32.mrb[0].mxu0
    %1213 = vdwg.mxu0
    %1214 = vst.msk [vmem:[#allocation2] sm:$0xff] %vm467, %v1206
    %1215 = vst.msk [vmem:[#allocation2 + $0x8] sm:$0xff] %vm467, %v1211
    %1216 = vrot.lane.b32.xlu0 %v1122, 80
    %v1217 = vpop.permute.xlu0 %1216
    %1218 = vrot.lane.b32.xlu0 %v1018, 80
    %v1219 = vpop.permute.xlu0 %1218
    %v1220 = vsel %vm467, %v1217, 0
    %v1222 = vsel %vm467, %v1219, 0
    %1224 = vmatprep.subr.mxu0 0.0
    %1225 = vmatpush1.msra.mxu0 %v1123
    %1226 = vmatprep.subr.mxu0 0.0
    %1227 = vmatpush1.msra.mxu0 %v1124
    %1228 = vmatprep.subr.mxu0 0.0
    %1229 = vmatpush1.msra.mxu0 0.0
    %1230 = vmatprep.subr.mxu0 0.0
    %1231 = vmatpush1.msra.mxu0 0.0
    %1232 = vmatprep.subr.mxu0 0.0
    %1233 = vmatpush1.msra.mxu0 0.0
    %1234 = vmatprep.subr.mxu0 0.0
    %1235 = vmatpush1.msra.mxu0 0.0
    %1236 = vmatprep.subr.mxu0 0.0
    %1237 = vmatpush1.msra.mxu0 0.0
    %1238 = vmatprep.subr.mxu0 0.0
    %1239 = vmatpush1.msra.mxu0 0.0
    %1240 = vmatprep.subr.mxu0 0.0
    %1241 = vmatpush1.msra.mxu0 0.0
    %1242 = vmatprep.subr.mxu0 0.0
    %1243 = vmatpush1.msra.mxu0 0.0
    %1244 = vmatprep.subr.mxu0 0.0
    %1245 = vmatpush1.msra.mxu0 0.0
    %1246 = vmatprep.subr.mxu0 0.0
    %1247 = vmatpush1.msra.mxu0 0.0
    %1248 = vmatprep.subr.mxu0 0.0
    %1249 = vmatpush1.msra.mxu0 0.0
    %1250 = vmatprep.subr.mxu0 0.0
    %1251 = vmatpush1.msra.mxu0 0.0
    %1252 = vmatprep.subr.mxu0 0.0
    %1253 = vmatpush1.msra.mxu0 0.0
    %1254 = vmatprep.subr.mxu0 0.0
    %1255 = vmatpush1.msra.mxu0 0.0
    %1256 = vmatprep.subr.mxu0 0.0
    %1257 = vmatpush1.msra.mxu0 0.0
    %1258 = vmatprep.subr.mxu0 0.0
    %1259 = vmatpush1.msra.mxu0 0.0
    %1260 = vmatprep.subr.mxu0 0.0
    %1261 = vmatpush1.msra.mxu0 0.0
    %1262 = vmatprep.subr.mxu0 0.0
    %1263 = vmatpush1.msra.mxu0 0.0
    %1264 = vmatprep.subr.mxu0 0.0
    %1265 = vmatpush1.msra.mxu0 0.0
    %1266 = vmatprep.subr.mxu0 0.0
    %1267 = vmatpush1.msra.mxu0 0.0
    %1268 = vmatprep.subr.mxu0 0.0
    %1269 = vmatpush1.msra.mxu0 0.0
    %1270 = vmatprep.subr.mxu0 0.0
    %1271 = vmatpush1.msra.mxu0 0.0
    %1272 = vmatprep.subr.mxu0 0.0
    %1273 = vmatpush1.msra.mxu0 0.0
    %1274 = vmatprep.subr.mxu0 0.0
    %1275 = vmatpush1.msra.mxu0 0.0
    %1276 = vmatprep.subr.mxu0 0.0
    %1277 = vmatpush1.msra.mxu0 0.0
    %1278 = vmatprep.subr.mxu0 0.0
    %1279 = vmatpush1.msra.mxu0 0.0
    %1280 = vmatprep.subr.mxu0 0.0
    %1281 = vmatpush1.msra.mxu0 0.0
    %1282 = vmatprep.subr.mxu0 0.0
    %1283 = vmatpush1.msra.mxu0 0.0
    %1284 = vmatprep.subr.mxu0 0.0
    %1285 = vmatpush1.msra.mxu0 0.0
    %1286 = vmatprep.subr.mxu0 0.0
    %1287 = vmatpush1.msra.mxu0 0.0
    %1288 = vmatprep.mubr.f32.mxu0 0.0
    %1289 = vmatmul.mubr.f32.gmra.mrb[0].mxu0 %v1220
    %v1290 = vpop.f32.mrb[0].mxu0
    %v1291 = vadd.f32 %v1130, %v1290
    %v1292 = vpop.f32.mrb[0].mxu0
    %1293 = vmatprep.mubr.f32.mxu0 0.0
    %1294 = vmatmul.mubr.f32.gmra.mrb[0].mxu0 %v1222
    %v1295 = vpop.f32.mrb[0].mxu0
    %v1296 = vadd.f32 %v1130, %v1295
    %v1297 = vpop.f32.mrb[0].mxu0
    %1298 = vdwg.mxu0
    %1299 = vst.msk [vmem:[#allocation4] sm:$0xff] %vm467, %v1291
    %1300 = vst.msk [vmem:[#allocation4 + $0x8] sm:$0xff] %vm467, %v1296
    %1301 = vrot.lane.b32.xlu0 %v1018, 112
    %v1302 = vpop.permute.xlu0 %1301
    %v1304 = vsub.f32 %v1018, %v1302
    %v1305 = vmul.f32 %v1304, %v1304
    %v1307 = vrot.slane %v1305, 1
    %1308 = vrot.lane.b32.xlu0 %v1307, 96
    %v1309 = vpop.permute.xlu0 %1308
    %v1311 = vsel %vm467, 1.0, 0
    %v1313 = vsel %vm467, %v1309, 0
    %1315 = vmatprep.subr.mxu0 0.0
    %1316 = vmatpush1.xpose.msra.mxu0 %v1313
    %1317 = vmatprep.subr.mxu0 0.0
    %1318 = vmatpush1.xpose.msra.mxu0 0.0
    %1319 = vmatprep.subr.mxu0 0.0
    %1320 = vmatpush1.xpose.msra.mxu0 0.0
    %1321 = vmatprep.subr.mxu0 0.0
    %1322 = vmatpush1.xpose.msra.mxu0 0.0
    %1323 = vmatprep.subr.mxu0 0.0
    %1324 = vmatpush1.xpose.msra.mxu0 0.0
    %1325 = vmatprep.subr.mxu0 0.0
    %1326 = vmatpush1.xpose.msra.mxu0 0.0
    %1327 = vmatprep.subr.mxu0 0.0
    %1328 = vmatpush1.xpose.msra.mxu0 0.0
    %1329 = vmatprep.subr.mxu0 0.0
    %1330 = vmatpush1.xpose.msra.mxu0 0.0
    %1331 = vmatprep.subr.mxu0 0.0
    %1332 = vmatpush1.xpose.msra.mxu0 0.0
    %1333 = vmatprep.subr.mxu0 0.0
    %1334 = vmatpush1.xpose.msra.mxu0 0.0
    %1335 = vmatprep.subr.mxu0 0.0
    %1336 = vmatpush1.xpose.msra.mxu0 0.0
    %1337 = vmatprep.subr.mxu0 0.0
    %1338 = vmatpush1.xpose.msra.mxu0 0.0
    %1339 = vmatprep.subr.mxu0 0.0
    %1340 = vmatpush1.xpose.msra.mxu0 0.0
    %1341 = vmatprep.subr.mxu0 0.0
    %1342 = vmatpush1.xpose.msra.mxu0 0.0
    %1343 = vmatprep.subr.mxu0 0.0
    %1344 = vmatpush1.xpose.msra.mxu0 0.0
    %1345 = vmatprep.subr.mxu0 0.0
    %1346 = vmatpush1.xpose.msra.mxu0 0.0
    %1347 = vmatprep.subr.mxu0 0.0
    %1348 = vmatpush1.xpose.msra.mxu0 0.0
    %1349 = vmatprep.subr.mxu0 0.0
    %1350 = vmatpush1.xpose.msra.mxu0 0.0
    %1351 = vmatprep.subr.mxu0 0.0
    %1352 = vmatpush1.xpose.msra.mxu0 0.0
    %1353 = vmatprep.subr.mxu0 0.0
    %1354 = vmatpush1.xpose.msra.mxu0 0.0
    %1355 = vmatprep.subr.mxu0 0.0
    %1356 = vmatpush1.xpose.msra.mxu0 0.0
    %1357 = vmatprep.subr.mxu0 0.0
    %1358 = vmatpush1.xpose.msra.mxu0 0.0
    %1359 = vmatprep.subr.mxu0 0.0
    %1360 = vmatpush1.xpose.msra.mxu0 0.0
    %1361 = vmatprep.subr.mxu0 0.0
    %1362 = vmatpush1.xpose.msra.mxu0 0.0
    %1363 = vmatprep.subr.mxu0 0.0
    %1364 = vmatpush1.xpose.msra.mxu0 0.0
    %1365 = vmatprep.subr.mxu0 0.0
    %1366 = vmatpush1.xpose.msra.mxu0 0.0
    %1367 = vmatprep.subr.mxu0 0.0
    %1368 = vmatpush1.xpose.msra.mxu0 0.0
    %1369 = vmatprep.subr.mxu0 0.0
    %1370 = vmatpush1.xpose.msra.mxu0 0.0
    %1371 = vmatprep.subr.mxu0 0.0
    %1372 = vmatpush1.xpose.msra.mxu0 0.0
    %1373 = vmatprep.subr.mxu0 0.0
    %1374 = vmatpush1.xpose.msra.mxu0 0.0
    %1375 = vmatprep.subr.mxu0 0.0
    %1376 = vmatpush1.xpose.msra.mxu0 0.0
    %1377 = vmatprep.subr.mxu0 0.0
    %1378 = vmatpush1.xpose.msra.mxu0 0.0
    %1379 = vmatprep.mubr.f32.mxu0 0.0
    %1380 = vmatmul.mubr.f32.gmra.mrb[0].mxu0 %v1311
    %v1381 = vpop.f32.mrb[0].mxu0
    %v1382 = vadd.f32 0.0, %v1381
    %v1383 = vpop.f32.mrb[0].mxu0
    %1384 = vdwg.mxu0
    %1385 = vrot.lane.b32.xlu0 %v1122, 112
    %v1386 = vpop.permute.xlu0 %1385
    %v1388 = vsub.f32 %v1122, %v1386
    %v1389 = vmul.f32 %v1388, %v1388
    %v1391 = vrot.slane %v1389, 1
    %1392 = vrot.lane.b32.xlu0 %v1391, 96
    %v1393 = vpop.permute.xlu0 %1392
    %v1394 = vsel %vm467, %v1393, 0
    %1396 = vmatprep.subr.mxu0 0.0
    %1397 = vmatpush1.xpose.msra.mxu0 %v1394
    %1398 = vmatprep.subr.mxu0 0.0
    %1399 = vmatpush1.xpose.msra.mxu0 0.0
    %1400 = vmatprep.subr.mxu0 0.0
    %1401 = vmatpush1.xpose.msra.mxu0 0.0
    %1402 = vmatprep.subr.mxu0 0.0
    %1403 = vmatpush1.xpose.msra.mxu0 0.0
    %1404 = vmatprep.subr.mxu0 0.0
    %1405 = vmatpush1.xpose.msra.mxu0 0.0
    %1406 = vmatprep.subr.mxu0 0.0
    %1407 = vmatpush1.xpose.msra.mxu0 0.0
    %1408 = vmatprep.subr.mxu0 0.0
    %1409 = vmatpush1.xpose.msra.mxu0 0.0
    %1410 = vmatprep.subr.mxu0 0.0
    %1411 = vmatpush1.xpose.msra.mxu0 0.0
    %1412 = vmatprep.subr.mxu0 0.0
    %1413 = vmatpush1.xpose.msra.mxu0 0.0
    %1414 = vmatprep.subr.mxu0 0.0
    %1415 = vmatpush1.xpose.msra.mxu0 0.0
    %1416 = vmatprep.subr.mxu0 0.0
    %1417 = vmatpush1.xpose.msra.mxu0 0.0
    %1418 = vmatprep.subr.mxu0 0.0
    %1419 = vmatpush1.xpose.msra.mxu0 0.0
    %1420 = vmatprep.subr.mxu0 0.0
    %1421 = vmatpush1.xpose.msra.mxu0 0.0
    %1422 = vmatprep.subr.mxu0 0.0
    %1423 = vmatpush1.xpose.msra.mxu0 0.0
    %1424 = vmatprep.subr.mxu0 0.0
    %1425 = vmatpush1.xpose.msra.mxu0 0.0
    %1426 = vmatprep.subr.mxu0 0.0
    %1427 = vmatpush1.xpose.msra.mxu0 0.0
    %1428 = vmatprep.subr.mxu0 0.0
    %1429 = vmatpush1.xpose.msra.mxu0 0.0
    %1430 = vmatprep.subr.mxu0 0.0
    %1431 = vmatpush1.xpose.msra.mxu0 0.0
    %1432 = vmatprep.subr.mxu0 0.0
    %1433 = vmatpush1.xpose.msra.mxu0 0.0
    %1434 = vmatprep.subr.mxu0 0.0
    %1435 = vmatpush1.xpose.msra.mxu0 0.0
    %1436 = vmatprep.subr.mxu0 0.0
    %1437 = vmatpush1.xpose.msra.mxu0 0.0
    %1438 = vmatprep.subr.mxu0 0.0
    %1439 = vmatpush1.xpose.msra.mxu0 0.0
    %1440 = vmatprep.subr.mxu0 0.0
    %1441 = vmatpush1.xpose.msra.mxu0 0.0
    %1442 = vmatprep.subr.mxu0 0.0
    %1443 = vmatpush1.xpose.msra.mxu0 0.0
    %1444 = vmatprep.subr.mxu0 0.0
    %1445 = vmatpush1.xpose.msra.mxu0 0.0
    %1446 = vmatprep.subr.mxu0 0.0
    %1447 = vmatpush1.xpose.msra.mxu0 0.0
    %1448 = vmatprep.subr.mxu0 0.0
    %1449 = vmatpush1.xpose.msra.mxu0 0.0
    %1450 = vmatprep.subr.mxu0 0.0
    %1451 = vmatpush1.xpose.msra.mxu0 0.0
    %1452 = vmatprep.subr.mxu0 0.0
    %1453 = vmatpush1.xpose.msra.mxu0 0.0
    %1454 = vmatprep.subr.mxu0 0.0
    %1455 = vmatpush1.xpose.msra.mxu0 0.0
    %1456 = vmatprep.subr.mxu0 0.0
    %1457 = vmatpush1.xpose.msra.mxu0 0.0
    %1458 = vmatprep.subr.mxu0 0.0
    %1459 = vmatpush1.xpose.msra.mxu0 0.0
    %1460 = vmatprep.mubr.f32.mxu0 0.0
    %1461 = vmatmul.mubr.f32.gmra.mrb[0].mxu0 %v1311
    %v1462 = vpop.f32.mrb[0].mxu0
    %v1463 = vadd.f32 0.0, %v1462
    %v1464 = vpop.f32.mrb[0].mxu0
    %1465 = vdwg.mxu0
    %v1467 = vrot.slane %v1463, 7
    %vm1469 = vcmask 1040384
    %v1470 = vsel %vm1469, %v1382, %v1467
    %v1471 = vrsqrt.pop %v1470
    %v1472 = vmul.f32 %v1470, %v1471
    %vm1473 = vcmp.eq.f32.partialorder %v1470, inf
    %v1474 = vsel %vm1473, %v1470, %v1472
    %vm1475 = vcmp.eq.f32.partialorder %v1470, 0.0
    %v1476 = vand.u32 %v1470, 2147483648
    %v1477 = vsel %vm1475, %v1476, %v1474
    %v1478 = vld [vmem:[%s17] sm:$0x7f]
    %v1479 = vld [vmem:[%s18] sm:$0x1]
    %v1481 = vlaneseq
    %v1482 = vshrl.u32 %v1481, 7
    %v1483 = vsub.s32 0, %v1482
    %v1484 = vrot.slane %v1479, %v1483
    %vm1486 = vcmask 56320
    %v1488 = vsel %vm1486, %v1477, 0
    %vm1490 = vcmask 1046528
    %v1492 = vsel %vm1490, %v1478, 0
    %1494 = vmatprep.subr.mxu0 0.0
    %1495 = vmatpush1.msra.mxu0 %v1492
    %1496 = vmatprep.subr.mxu0 0.0
    %1497 = vmatpush1.msra.mxu0 0.0
    %1498 = vmatprep.subr.mxu0 0.0
    %1499 = vmatpush1.msra.mxu0 0.0
    %1500 = vmatprep.subr.mxu0 0.0
    %1501 = vmatpush1.msra.mxu0 0.0
    %1502 = vmatprep.subr.mxu0 0.0
    %1503 = vmatpush1.msra.mxu0 0.0
    %1504 = vmatprep.subr.mxu0 0.0
    %1505 = vmatpush1.msra.mxu0 0.0
    %1506 = vmatprep.subr.mxu0 0.0
    %1507 = vmatpush1.msra.mxu0 0.0
    %1508 = vmatprep.subr.mxu0 0.0
    %1509 = vmatpush1.msra.mxu0 0.0
    %1510 = vmatprep.subr.mxu0 0.0
    %1511 = vmatpush1.msra.mxu0 0.0
    %1512 = vmatprep.subr.mxu0 0.0
    %1513 = vmatpush1.msra.mxu0 0.0
    %1514 = vmatprep.subr.mxu0 0.0
    %1515 = vmatpush1.msra.mxu0 0.0
    %1516 = vmatprep.subr.mxu0 0.0
    %1517 = vmatpush1.msra.mxu0 0.0
    %1518 = vmatprep.subr.mxu0 0.0
    %1519 = vmatpush1.msra.mxu0 0.0
    %1520 = vmatprep.subr.mxu0 0.0
    %1521 = vmatpush1.msra.mxu0 0.0
    %1522 = vmatprep.subr.mxu0 0.0
    %1523 = vmatpush1.msra.mxu0 0.0
    %1524 = vmatprep.subr.mxu0 0.0
    %1525 = vmatpush1.msra.mxu0 0.0
    %1526 = vmatprep.subr.mxu0 0.0
    %1527 = vmatpush1.msra.mxu0 0.0
    %1528 = vmatprep.subr.mxu0 0.0
    %1529 = vmatpush1.msra.mxu0 0.0
    %1530 = vmatprep.subr.mxu0 0.0
    %1531 = vmatpush1.msra.mxu0 0.0
    %1532 = vmatprep.subr.mxu0 0.0
    %1533 = vmatpush1.msra.mxu0 0.0
    %1534 = vmatprep.subr.mxu0 0.0
    %1535 = vmatpush1.msra.mxu0 0.0
    %1536 = vmatprep.subr.mxu0 0.0
    %1537 = vmatpush1.msra.mxu0 0.0
    %1538 = vmatprep.subr.mxu0 0.0
    %1539 = vmatpush1.msra.mxu0 0.0
    %1540 = vmatprep.subr.mxu0 0.0
    %1541 = vmatpush1.msra.mxu0 0.0
    %1542 = vmatprep.subr.mxu0 0.0
    %1543 = vmatpush1.msra.mxu0 0.0
    %1544 = vmatprep.subr.mxu0 0.0
    %1545 = vmatpush1.msra.mxu0 0.0
    %1546 = vmatprep.subr.mxu0 0.0
    %1547 = vmatpush1.msra.mxu0 0.0
    %1548 = vmatprep.subr.mxu0 0.0
    %1549 = vmatpush1.msra.mxu0 0.0
    %1550 = vmatprep.subr.mxu0 0.0
    %1551 = vmatpush1.msra.mxu0 0.0
    %1552 = vmatprep.subr.mxu0 0.0
    %1553 = vmatpush1.msra.mxu0 0.0
    %1554 = vmatprep.subr.mxu0 0.0
    %1555 = vmatpush1.msra.mxu0 0.0
    %1556 = vmatprep.subr.mxu0 0.0
    %1557 = vmatpush1.msra.mxu0 0.0
    %1558 = vmatprep.mubr.f32.mxu0 0.0
    %1559 = vmatmul.mubr.f32.gmra.mrb[0].mxu0 %v1488
    %v1560 = vpop.f32.mrb[0].mxu0
    %v1561 = vadd.f32 %v1484, %v1560
    %v1562 = vpop.f32.mrb[0].mxu0
    %1563 = vdwg.mxu0
    %v1564 = vld [vmem:[%s19] sm:$0x7f]
    %v1565 = vld [vmem:[%s20] sm:$0x1]
    %v1567 = vlaneseq
    %v1568 = vshrl.u32 %v1567, 7
    %v1569 = vsub.s32 0, %v1568
    %v1570 = vrot.slane %v1565, %v1569
    %v1573 = vsel %vm1486, %v1561, 0
    %v1576 = vsel %vm1490, %v1564, 0
    %1578 = vmatprep.subr.mxu0 0.0
    %1579 = vmatpush1.msra.mxu0 %v1576
    %1580 = vmatprep.subr.mxu0 0.0
    %1581 = vmatpush1.msra.mxu0 0.0
    %1582 = vmatprep.subr.mxu0 0.0
    %1583 = vmatpush1.msra.mxu0 0.0
    %1584 = vmatprep.subr.mxu0 0.0
    %1585 = vmatpush1.msra.mxu0 0.0
    %1586 = vmatprep.subr.mxu0 0.0
    %1587 = vmatpush1.msra.mxu0 0.0
    %1588 = vmatprep.subr.mxu0 0.0
    %1589 = vmatpush1.msra.mxu0 0.0
    %1590 = vmatprep.subr.mxu0 0.0
    %1591 = vmatpush1.msra.mxu0 0.0
    %1592 = vmatprep.subr.mxu0 0.0
    %1593 = vmatpush1.msra.mxu0 0.0
    %1594 = vmatprep.subr.mxu0 0.0
    %1595 = vmatpush1.msra.mxu0 0.0
    %1596 = vmatprep.subr.mxu0 0.0
    %1597 = vmatpush1.msra.mxu0 0.0
    %1598 = vmatprep.subr.mxu0 0.0
    %1599 = vmatpush1.msra.mxu0 0.0
    %1600 = vmatprep.subr.mxu0 0.0
    %1601 = vmatpush1.msra.mxu0 0.0
    %1602 = vmatprep.subr.mxu0 0.0
    %1603 = vmatpush1.msra.mxu0 0.0
    %1604 = vmatprep.subr.mxu0 0.0
    %1605 = vmatpush1.msra.mxu0 0.0
    %1606 = vmatprep.subr.mxu0 0.0
    %1607 = vmatpush1.msra.mxu0 0.0
    %1608 = vmatprep.subr.mxu0 0.0
    %1609 = vmatpush1.msra.mxu0 0.0
    %1610 = vmatprep.subr.mxu0 0.0
    %1611 = vmatpush1.msra.mxu0 0.0
    %1612 = vmatprep.subr.mxu0 0.0
    %1613 = vmatpush1.msra.mxu0 0.0
    %1614 = vmatprep.subr.mxu0 0.0
    %1615 = vmatpush1.msra.mxu0 0.0
    %1616 = vmatprep.subr.mxu0 0.0
    %1617 = vmatpush1.msra.mxu0 0.0
    %1618 = vmatprep.subr.mxu0 0.0
    %1619 = vmatpush1.msra.mxu0 0.0
    %1620 = vmatprep.subr.mxu0 0.0
    %1621 = vmatpush1.msra.mxu0 0.0
    %1622 = vmatprep.subr.mxu0 0.0
    %1623 = vmatpush1.msra.mxu0 0.0
    %1624 = vmatprep.subr.mxu0 0.0
    %1625 = vmatpush1.msra.mxu0 0.0
    %1626 = vmatprep.subr.mxu0 0.0
    %1627 = vmatpush1.msra.mxu0 0.0
    %1628 = vmatprep.subr.mxu0 0.0
    %1629 = vmatpush1.msra.mxu0 0.0
    %1630 = vmatprep.subr.mxu0 0.0
    %1631 = vmatpush1.msra.mxu0 0.0
    %1632 = vmatprep.subr.mxu0 0.0
    %1633 = vmatpush1.msra.mxu0 0.0
    %1634 = vmatprep.subr.mxu0 0.0
    %1635 = vmatpush1.msra.mxu0 0.0
    %1636 = vmatprep.subr.mxu0 0.0
    %1637 = vmatpush1.msra.mxu0 0.0
    %1638 = vmatprep.subr.mxu0 0.0
    %1639 = vmatpush1.msra.mxu0 0.0
    %1640 = vmatprep.subr.mxu0 0.0
    %1641 = vmatpush1.msra.mxu0 0.0
    %1642 = vmatprep.mubr.f32.mxu0 0.0
    %1643 = vmatmul.mubr.f32.gmra.mrb[0].mxu0 %v1573
    %v1644 = vpop.f32.mrb[0].mxu0
    %v1645 = vadd.f32 %v1570, %v1644
    %v1646 = vpop.f32.mrb[0].mxu0
    %1647 = vdwg.mxu0
    %v1648 = vxor.u32 %v1645, 2147483648
    %v1649 = vmul.f32 %v1648, 1.442695
    %v1650 = vpow.pop %v1649
    %v1651 = vadd.f32 %v1650, 1.0
    %v1652 = vrcp.pop %v1651
    %v1653 = vmul.f32 1.0, %v1652
    %vm1654 = vcmask 107520
    %1655 = vst.msk [vmem:[#allocation6] sm:$0x3] %vm1654, %v1653
    %v1656 = vld [vmem:[%s21] sm:$0x7f]
    %v1657 = vld [vmem:[%s22] sm:$0x1]
    %v1659 = vlaneseq
    %v1660 = vshrl.u32 %v1659, 7
    %v1661 = vsub.s32 0, %v1660
    %v1662 = vrot.slane %v1657, %v1661
    %v1665 = vsel %vm1490, %v1656, 0
    %1667 = vmatprep.subr.mxu0 0.0
    %1668 = vmatpush1.msra.mxu0 %v1665
    %1669 = vmatprep.subr.mxu0 0.0
    %1670 = vmatpush1.msra.mxu0 0.0
    %1671 = vmatprep.subr.mxu0 0.0
    %1672 = vmatpush1.msra.mxu0 0.0
    %1673 = vmatprep.subr.mxu0 0.0
    %1674 = vmatpush1.msra.mxu0 0.0
    %1675 = vmatprep.subr.mxu0 0.0
    %1676 = vmatpush1.msra.mxu0 0.0
    %1677 = vmatprep.subr.mxu0 0.0
    %1678 = vmatpush1.msra.mxu0 0.0
    %1679 = vmatprep.subr.mxu0 0.0
    %1680 = vmatpush1.msra.mxu0 0.0
    %1681 = vmatprep.subr.mxu0 0.0
    %1682 = vmatpush1.msra.mxu0 0.0
    %1683 = vmatprep.subr.mxu0 0.0
    %1684 = vmatpush1.msra.mxu0 0.0
    %1685 = vmatprep.subr.mxu0 0.0
    %1686 = vmatpush1.msra.mxu0 0.0
    %1687 = vmatprep.subr.mxu0 0.0
    %1688 = vmatpush1.msra.mxu0 0.0
    %1689 = vmatprep.subr.mxu0 0.0
    %1690 = vmatpush1.msra.mxu0 0.0
    %1691 = vmatprep.subr.mxu0 0.0
    %1692 = vmatpush1.msra.mxu0 0.0
    %1693 = vmatprep.subr.mxu0 0.0
    %1694 = vmatpush1.msra.mxu0 0.0
    %1695 = vmatprep.subr.mxu0 0.0
    %1696 = vmatpush1.msra.mxu0 0.0
    %1697 = vmatprep.subr.mxu0 0.0
    %1698 = vmatpush1.msra.mxu0 0.0
    %1699 = vmatprep.subr.mxu0 0.0
    %1700 = vmatpush1.msra.mxu0 0.0
    %1701 = vmatprep.subr.mxu0 0.0
    %1702 = vmatpush1.msra.mxu0 0.0
    %1703 = vmatprep.subr.mxu0 0.0
    %1704 = vmatpush1.msra.mxu0 0.0
    %1705 = vmatprep.subr.mxu0 0.0
    %1706 = vmatpush1.msra.mxu0 0.0
    %1707 = vmatprep.subr.mxu0 0.0
    %1708 = vmatpush1.msra.mxu0 0.0
    %1709 = vmatprep.subr.mxu0 0.0
    %1710 = vmatpush1.msra.mxu0 0.0
    %1711 = vmatprep.subr.mxu0 0.0
    %1712 = vmatpush1.msra.mxu0 0.0
    %1713 = vmatprep.subr.mxu0 0.0
    %1714 = vmatpush1.msra.mxu0 0.0
    %1715 = vmatprep.subr.mxu0 0.0
    %1716 = vmatpush1.msra.mxu0 0.0
    %1717 = vmatprep.subr.mxu0 0.0
    %1718 = vmatpush1.msra.mxu0 0.0
    %1719 = vmatprep.subr.mxu0 0.0
    %1720 = vmatpush1.msra.mxu0 0.0
    %1721 = vmatprep.subr.mxu0 0.0
    %1722 = vmatpush1.msra.mxu0 0.0
    %1723 = vmatprep.subr.mxu0 0.0
    %1724 = vmatpush1.msra.mxu0 0.0
    %1725 = vmatprep.subr.mxu0 0.0
    %1726 = vmatpush1.msra.mxu0 0.0
    %1727 = vmatprep.subr.mxu0 0.0
    %1728 = vmatpush1.msra.mxu0 0.0
    %1729 = vmatprep.subr.mxu0 0.0
    %1730 = vmatpush1.msra.mxu0 0.0
    %1731 = vmatprep.mubr.f32.mxu0 0.0
    %1732 = vmatmul.mubr.f32.gmra.mrb[0].mxu0 %v1488
    %v1733 = vpop.f32.mrb[0].mxu0
    %v1734 = vadd.f32 %v1662, %v1733
    %v1735 = vpop.f32.mrb[0].mxu0
    %1736 = vdwg.mxu0
    %v1737 = vxor.u32 %v1734, 2147483648
    %v1738 = vmul.f32 %v1737, 1.442695
    %v1739 = vpow.pop %v1738
    %v1740 = vadd.f32 %v1739, 1.0
    %v1741 = vrcp.pop %v1740
    %v1742 = vmul.f32 1.0, %v1741
    %vm1743 = vcmask 9216
    %1744 = vst.msk [vmem:[#allocation7] sm:$0x3] %vm1743, %v1742
    // Predicated region
    $region94: #{cleaving_forward.1} parent=1 // pred_check
      _
    $region95: #{cleaving_forward.1} parent=1 // pred_check_branch
      %1746 = sbr.rel (0) target = $region97
    $region96: #{cleaving_forward.1} parent=1 // pred_region
      %s1748 = ssub.s32 256, 256
      %1749 = vsyncadd [#allocation3], %s1748
      %s1750 = sshll.u32 [#allocation2], 4
      %s1751 = int_to_ptr.vmem [resolvable:$true] %s1750
      %1756 = dma.vmem_to_hbm [thread:$0]  %s1751, 256, %s23, [#allocation3], 128, 128, 8
    $region97: #{cleaving_forward.1} parent=1 // pred_fallthru
      _
    // Predicated region
    $region98: #{cleaving_forward.1} parent=1 // pred_check
      _
    $region99: #{cleaving_forward.1} parent=1 // pred_check_branch
      %1758 = sbr.rel (0) target = $region101
    $region100: #{cleaving_forward.1} parent=1 // pred_region
      %s1760 = ssub.s32 256, 256
      %1761 = vsyncadd [#allocation5], %s1760
      %s1762 = sshll.u32 [#allocation4], 4
      %s1763 = int_to_ptr.vmem [resolvable:$true] %s1762
      %1768 = dma.vmem_to_hbm [thread:$0]  %s1763, 256, %s24, [#allocation5], 128, 128, 8
    $region101: #{cleaving_forward.1} parent=1 // pred_fallthru
      _
    // Predicated region
    $region102: #{cleaving_forward.1} parent=1 // pred_check
      _
    $region103: #{cleaving_forward.1} parent=1 // pred_check_branch
      %1770 = sbr.rel (0) target = $region105
    $region104: #{cleaving_forward.1} parent=1 // pred_region
      %s1772 = ssub.s32 32, 32
      %1773 = vsyncadd [#allocation5], %s1772
      %s1775 = sshll.u32 [#allocation6], 4
      %s1776 = int_to_ptr.vmem [resolvable:$true] %s1775
      %1778 = dma.vmem_to_hbm [thread:$0]  %s1776, 32, %s25, [#allocation5]
    $region105: #{cleaving_forward.1} parent=1 // pred_fallthru
      _
    // Predicated region
    $region106: #{cleaving_forward.1} parent=1 // pred_check
      _
    $region107: #{cleaving_forward.1} parent=1 // pred_check_branch
      %1780 = sbr.rel (0) target = $region109
    $region108: #{cleaving_forward.1} parent=1 // pred_region
      %s1782 = ssub.s32 32, 32
      %1783 = vsyncadd [#allocation8], %s1782
      %s1785 = sshll.u32 [#allocation7], 4
      %s1786 = int_to_ptr.vmem [resolvable:$true] %s1785
      %1788 = dma.vmem_to_hbm [thread:$0]  %s1786, 32, %s26, [#allocation8]
    $region109: #{cleaving_forward.1} parent=1 // pred_fallthru
      _
    // Predicated region
    $region110: #{cleaving_forward.1} parent=1 // pred_check
      _
    $region111: #{cleaving_forward.1} parent=1 // pred_check_branch
      %1790 = sbr.rel (0) target = $region113
    $region112: #{cleaving_forward.1} parent=1 // pred_region
      %1791 = dma.done [#allocation3], 256
    $region113: #{cleaving_forward.1} parent=1 // pred_fallthru
      _
    // Predicated region
    $region114: #{cleaving_forward.1} parent=1 // pred_check
      _
    $region115: #{cleaving_forward.1} parent=1 // pred_check_branch
      %1793 = sbr.rel (0) target = $region117
    $region116: #{cleaving_forward.1} parent=1 // pred_region
      %1794 = dma.done [#allocation5], 256
    $region117: #{cleaving_forward.1} parent=1 // pred_fallthru
      _
    // Predicated region
    $region118: #{cleaving_forward.1} parent=1 // pred_check
      _
    $region119: #{cleaving_forward.1} parent=1 // pred_check_branch
      %1796 = sbr.rel (0) target = $region121
    $region120: #{cleaving_forward.1} parent=1 // pred_region
      %1797 = dma.done [#allocation5], 32
    $region121: #{cleaving_forward.1} parent=1 // pred_fallthru
      _
    // Predicated region
    $region122: #{cleaving_forward.1} parent=1 // pred_check
      _
    $region123: #{cleaving_forward.1} parent=1 // pred_check_branch
      %1799 = sbr.rel (0) target = $region125
    $region124: #{cleaving_forward.1} parent=1 // pred_region
      %1800 = dma.done [#allocation8], 32
    $region125: #{cleaving_forward.1} parent=1 // pred_fallthru
      _
    %1801 = vsyncpa [#allocation3], 1
    %1802 = vsyncpa [#allocation5], 1
    %1803 = vsyncpa [#allocation8], 1

</llo_original>
